<compile_context>
chip_gen: v5e
topology: v5e:2x2
jax: 0.10.0
libtpu: 0.0.40
codegen_flags: <defaults>
</compile_context>

<pallas_src>
import math
import jax
import jax.numpy as jnp
from jax.experimental import pallas as pl
from jax.experimental.pallas import tpu as pltpu

SQRT_2_OVER_PI = math.sqrt(2.0 / math.pi)


def _round_up(a, b):
    return ((a + b - 1) // b) * b


def _ffn_kernel(x_ref, w1_ref, b1_ref, w2_ref, b2_ref, o_ref, acc_ref):
    # x_ref:  (tm, nx)         w1_ref: (nx, tn)   b1_ref: (1, tn)
    # w2_ref: (tn, nx)         b2_ref: (1, nx)
    # o_ref:  (tm, nx)         acc_ref: (tm, nx) f32 scratch
    j = pl.program_id(1)

    @pl.when(j == 0)
    def _init():
        acc_ref[...] = jnp.zeros_like(acc_ref)

    # First GEMM: bf16 (or f32) operands, f32 accumulation on the MXU.
    x = x_ref[...].astype(w1_ref.dtype)
    h = jnp.dot(x, w1_ref[...], preferred_element_type=jnp.float32)
    h = h + b1_ref[...]  # bias + gelu in f32 (keeps v5e VPU/EUP happy)

    # tanh-approx GELU, exactly as in the PyTorch module.
    theta = 1.0 + jnp.tanh(SQRT_2_OVER_PI * (h + 0.044715 * h * h * h))
    h = 0.5 * h * theta

    # Second GEMM over this hidden slice, accumulate in f32 scratch.
    acc_ref[...] += jnp.dot(h.astype(w2_ref.dtype), w2_ref[...],
                            preferred_element_type=jnp.float32)

    @pl.when(j == pl.num_programs(1) - 1)
    def _finalize():
        o_ref[...] = (acc_ref[...] + b2_ref[...]).astype(o_ref.dtype)


def ffn_pallas(x, w1, b1, w2, b2, *, tm=256, tn=512,
               compute_dtype=jnp.bfloat16):
    """x: (M, nx). w1: (nx, n_state), b1: (1, n_state), w2: (n_state, nx),
    b2: (1, nx). Returns (M, nx) in x.dtype."""
    M, nx = x.shape
    n_state = w1.shape[1]

    # --- tile sizing -------------------------------------------------------
    # Row tile: big enough to feed the MXU, but no bigger than (padded) M.
    tm = min(tm, _round_up(M, 128))
    M_pad = _round_up(M, tm)
    if M_pad != M:
        x = jnp.pad(x, ((0, M_pad - M), (0, 0)))

    # Hidden tile: must be a multiple of 128 or the full hidden dim.
    tn = min(tn, n_state)
    assert n_state % tn == 0, "n_state must be divisible by the hidden tile tn"
    assert tn == n_state or tn % 128 == 0, "tn must be lane-aligned (x128)"
    # TODO(synk): for nx not a multiple of 128, pad the feature dim in the
    # wrapper too (masked partial stores otherwise); demo uses nx=128.

    # Cast weights once here -> halves weight HBM->VMEM DMA for bf16.
    if compute_dtype is not None:
        w1c = w1.astype(compute_dtype)
        w2c = w2.astype(compute_dtype)
    else:
        w1c, w2c = w1, w2

    grid = (M_pad // tm, n_state // tn)

    flops = 2 * M_pad * nx * n_state * 2          # two GEMMs
    bytes_accessed = (x.size * x.dtype.itemsize
                      + w1c.size * w1c.dtype.itemsize
                      + w2c.size * w2c.dtype.itemsize
                      + b1.size * b1.dtype.itemsize
                      + b2.size * b2.dtype.itemsize
                      + M_pad * nx * x.dtype.itemsize)

    out = pl.pallas_call(
        _ffn_kernel,
        out_shape=jax.ShapeDtypeStruct((M_pad, nx), x.dtype),
        grid_spec=pltpu.PrefetchScalarGridSpec(
            num_scalar_prefetch=0,
            grid=grid,
            in_specs=[
                pl.BlockSpec((tm, nx), lambda i, j: (i, 0)),   # x row tile
                pl.BlockSpec((nx, tn), lambda i, j: (0, j)),   # W1 hidden slice
                pl.BlockSpec((1, tn), lambda i, j: (0, j)),    # b1 slice
                pl.BlockSpec((tn, nx), lambda i, j: (j, 0)),   # W2 hidden slice
                pl.BlockSpec((1, nx), lambda i, j: (0, 0)),    # b2 (resident)
            ],
            out_specs=pl.BlockSpec((tm, nx), lambda i, j: (i, 0)),
            scratch_shapes=[pltpu.VMEM((tm, nx), jnp.float32)],
        ),
        compiler_params=pltpu.CompilerParams(
            dimension_semantics=("parallel", "arbitrary"),
            vmem_limit_bytes=48 * 1024 * 1024,   # fits v7x's 64 MiB/TC too
        ),
        cost_estimate=pl.CostEstimate(
            flops=flops,
            transcendentals=M_pad * n_state,     # one tanh per hidden element
            bytes_accessed=bytes_accessed,
        ),
    )(x, w1c, b1, w2c, b2)

    return out[:M]


def ffn_reference(x, w1, b1, w2, b2):
    h = x @ w1 + b1
    theta = 1.0 + jnp.tanh(SQRT_2_OVER_PI * (h + 0.044715 * h ** 3))
    h = 0.5 * h * theta
    return h @ w2 + b2


if __name__ == "__main__":
    # Small, lane-friendly config: n_embd (nx) = 128, n_state = 4*nx = 512,
    # batch=2, seq=8 -> 16 tokens.
    key = jax.random.PRNGKey(0)
    k_x, k_w1, k_b1, k_w2, k_b2 = jax.random.split(key, 5)

    B, T, nx, n_state = 2, 8, 128, 512

    x = jax.random.normal(k_x, (B, T, nx), dtype=jnp.float32)

    # nn.Linear(nx, n_state) / nn.Linear(n_state, nx) weights, stored already
    # transposed to (in, out) so the kernel does plain x @ W.
    w1 = jax.random.normal(k_w1, (nx, n_state), dtype=jnp.float32) * 0.02
    b1 = jax.random.normal(k_b1, (1, n_state), dtype=jnp.float32) * 0.02
    w2 = jax.random.normal(k_w2, (n_state, nx), dtype=jnp.float32) * 0.02
    b2 = jax.random.normal(k_b2, (1, nx), dtype=jnp.float32) * 0.02

    x2d = x.reshape(B * T, nx)
    ref = ffn_reference(x2d, w1, b1, w2, b2).reshape(B, T, nx)

    # bf16-matmul path (default): loose tolerance per bf16 mantissa.
    out = ffn_pallas(x2d, w1, b1, w2, b2).reshape(B, T, nx)
    jax.block_until_ready(out)
    assert out.shape == (B, T, nx)
    assert jnp.allclose(out, ref, atol=2e-2, rtol=2e-2), "bf16 path mismatch"

    # f32 path: tight tolerance vs. reference.
    out_f32 = ffn_pallas(x2d, w1, b1, w2, b2, compute_dtype=None)
    out_f32 = out_f32.reshape(B, T, nx)
    jax.block_until_ready(out_f32)
    assert jnp.allclose(out_f32, ref, atol=1e-5, rtol=1e-5), "f32 path mismatch"

    print("KERNEL_OK")
</pallas_src>

<mosaic_0001>
module attributes {stable_mosaic.version = 11 : i64} {
  func.func @_ffn_kernel(%arg0: i32, %arg1: i32, %arg2: memref<128x128xf32, #tpu.memory_space<vmem>>, %arg3: memref<128x512xbf16, #tpu.memory_space<vmem>>, %arg4: memref<1x512xf32, #tpu.memory_space<vmem>>, %arg5: memref<512x128xbf16, #tpu.memory_space<vmem>>, %arg6: memref<1x128xf32, #tpu.memory_space<vmem>>, %arg7: memref<128x128xf32, #tpu.memory_space<vmem>>, %arg8: memref<128x128xf32, #tpu.memory_space<vmem>>) attributes {dimension_semantics = [#tpu.dimension_semantics<parallel>, #tpu.dimension_semantics<arbitrary>], iteration_bounds = array<i64: 1, 1>, scalar_prefetch = 0 : i64, scratch_operands = 1 : i64, tpu.core_type = #tpu.core_type<tc>, window_params = [{transform_indices = @transform_0, window_bounds = array<i64: 128, 128>}, {transform_indices = @transform_1, window_bounds = array<i64: 128, 512>}, {transform_indices = @transform_2, window_bounds = array<i64: 1, 512>}, {transform_indices = @transform_3, window_bounds = array<i64: 512, 128>}, {pipeline_mode = #tpu.pipeline_mode<synchronous>, transform_indices = @transform_4, window_bounds = array<i64: 1, 128>}, {transform_indices = @transform_5, window_bounds = array<i64: 128, 128>}]} {
    %c0_i32 = arith.constant 0 : i32
    %0 = arith.cmpi eq, %arg1, %c0_i32 : i32
    %1 = arith.extui %0 : i1 to i32
    %c0_i32_0 = arith.constant 0 : i32
    %2 = arith.cmpi ne, %1, %c0_i32_0 : i32
    scf.if %2 {
      %cst_19 = arith.constant 0.000000e+00 : f32
      %32 = vector.broadcast %cst_19 : f32 to vector<128x128xf32>
      %c0_20 = arith.constant 0 : index
      %c0_21 = arith.constant 0 : index
      %33 = vector.load %arg8[%c0_20, %c0_21] : memref<128x128xf32, #tpu.memory_space<vmem>>, vector<128x128xf32>
      tpu.vector_store %arg8[%c0_20, %c0_21], %32 {strides = array<i32>} : memref<128x128xf32, #tpu.memory_space<vmem>>, vector<128x128xf32>,
    } else {
    }
    %c0 = arith.constant 0 : index
    %c0_1 = arith.constant 0 : index
    %3 = vector.load %arg2[%c0, %c0_1] : memref<128x128xf32, #tpu.memory_space<vmem>>, vector<128x128xf32>
    %4 = arith.truncf %3 : vector<128x128xf32> to vector<128x128xbf16>
    %c0_2 = arith.constant 0 : index
    %c0_3 = arith.constant 0 : index
    %5 = vector.load %arg3[%c0_2, %c0_3] : memref<128x512xbf16, #tpu.memory_space<vmem>>, vector<128x512xbf16>
    %cst = arith.constant dense<0.000000e+00> : vector<128x512xf32>
    %6 = tpu.matmul %4, %5, %cst {dimension_numbers = #tpu.dot_dimension_numbers<[1], [0], [0], [1], [0, 0, 1, 1], [], []>} : vector<128x128xbf16>, vector<128x512xbf16>, vector<128x512xf32> -> vector<128x512xf32>
    %c0_4 = arith.constant 0 : index
    %c0_5 = arith.constant 0 : index
    %7 = vector.load %arg4[%c0_4, %c0_5] : memref<1x512xf32, #tpu.memory_space<vmem>>, vector<1x512xf32>
    %8 = vector.broadcast %7 : vector<1x512xf32> to vector<128x512xf32>
    %9 = arith.addf %6, %8 : vector<128x512xf32>
    %cst_6 = arith.constant 4.471500e-02 : f32
    %10 = vector.broadcast %cst_6 : f32 to vector<128x512xf32>
    %11 = arith.mulf %10, %9 : vector<128x512xf32>
    %12 = arith.mulf %11, %9 : vector<128x512xf32>
    %13 = arith.mulf %12, %9 : vector<128x512xf32>
    %14 = arith.addf %9, %13 : vector<128x512xf32>
    %cst_7 = arith.constant 0.797884583 : f32
    %15 = vector.broadcast %cst_7 : f32 to vector<128x512xf32>
    %16 = arith.mulf %15, %14 : vector<128x512xf32>
    %17 = math.tanh %16 : vector<128x512xf32>
    %cst_8 = arith.constant 1.000000e+00 : f32
    %18 = vector.broadcast %cst_8 : f32 to vector<128x512xf32>
    %19 = arith.addf %18, %17 : vector<128x512xf32>
    %cst_9 = arith.constant 5.000000e-01 : f32
    %20 = vector.broadcast %cst_9 : f32 to vector<128x512xf32>
    %21 = arith.mulf %20, %9 : vector<128x512xf32>
    %22 = arith.mulf %21, %19 : vector<128x512xf32>
    %c0_10 = arith.constant 0 : index
    %c0_11 = arith.constant 0 : index
    %23 = vector.load %arg8[%c0_10, %c0_11] : memref<128x128xf32, #tpu.memory_space<vmem>>, vector<128x128xf32>
    %24 = arith.truncf %22 : vector<128x512xf32> to vector<128x512xbf16>
    %c0_12 = arith.constant 0 : index
    %c0_13 = arith.constant 0 : index
    %25 = vector.load %arg5[%c0_12, %c0_13] : memref<512x128xbf16, #tpu.memory_space<vmem>>, vector<512x128xbf16>
    %cst_14 = arith.constant dense<0.000000e+00> : vector<128x128xf32>
    %26 = tpu.matmul %24, %25, %cst_14 {dimension_numbers = #tpu.dot_dimension_numbers<[1], [0], [0], [1], [0, 0, 1, 1], [], []>} : vector<128x512xbf16>, vector<512x128xbf16>, vector<128x128xf32> -> vector<128x128xf32>
    %27 = arith.addf %23, %26 : vector<128x128xf32>
    %c0_15 = arith.constant 0 : index
    %c0_16 = arith.constant 0 : index
    %28 = vector.load %arg8[%c0_15, %c0_16] : memref<128x128xf32, #tpu.memory_space<vmem>>, vector<128x128xf32>
    tpu.vector_store %arg8[%c0_15, %c0_16], %27 {strides = array<i32>} : memref<128x128xf32, #tpu.memory_space<vmem>>, vector<128x128xf32>,
    %c0_i32_17 = arith.constant 0 : i32
    %29 = arith.cmpi eq, %arg1, %c0_i32_17 : i32
    %30 = arith.extui %29 : i1 to i32
    %c0_i32_18 = arith.constant 0 : i32
    %31 = arith.cmpi ne, %30, %c0_i32_18 : i32
    scf.if %31 {
      %c0_19 = arith.constant 0 : index
      %c0_20 = arith.constant 0 : index
      %32 = vector.load %arg8[%c0_19, %c0_20] : memref<128x128xf32, #tpu.memory_space<vmem>>, vector<128x128xf32>
      %c0_21 = arith.constant 0 : index
      %c0_22 = arith.constant 0 : index
      %33 = vector.load %arg6[%c0_21, %c0_22] : memref<1x128xf32, #tpu.memory_space<vmem>>, vector<1x128xf32>
      %34 = vector.broadcast %33 : vector<1x128xf32> to vector<128x128xf32>
      %35 = arith.addf %32, %34 : vector<128x128xf32>
      %c0_23 = arith.constant 0 : index
      %c0_24 = arith.constant 0 : index
      %36 = vector.load %arg7[%c0_23, %c0_24] : memref<128x128xf32, #tpu.memory_space<vmem>>, vector<128x128xf32>
      tpu.vector_store %arg7[%c0_23, %c0_24], %35 {strides = array<i32>} : memref<128x128xf32, #tpu.memory_space<vmem>>, vector<128x128xf32>,
    } else {
    }
    return
  }
  func.func @transform_0(%arg0: i32, %arg1: i32) -> (i32, i32) {
    %c0_i32 = arith.constant 0 : i32
    %c0_i32_0 = arith.constant 0 : i32
    return %arg0, %c0_i32 : i32, i32
  }
  func.func @transform_1(%arg0: i32, %arg1: i32) -> (i32, i32) {
    %c0_i32 = arith.constant 0 : i32
    %c0_i32_0 = arith.constant 0 : i32
    return %c0_i32, %arg1 : i32, i32
  }
  func.func @transform_2(%arg0: i32, %arg1: i32) -> (i32, i32) {
    %c0_i32 = arith.constant 0 : i32
    %c0_i32_0 = arith.constant 0 : i32
    return %c0_i32, %arg1 : i32, i32
  }
  func.func @transform_3(%arg0: i32, %arg1: i32) -> (i32, i32) {
    %c0_i32 = arith.constant 0 : i32
    %c0_i32_0 = arith.constant 0 : i32
    return %arg1, %c0_i32 : i32, i32
  }
  func.func @transform_4(%arg0: i32, %arg1: i32) -> (i32, i32) {
    %c0_i32 = arith.constant 0 : i32
    %c0_i32_0 = arith.constant 0 : i32
    %c0_i32_1 = arith.constant 0 : i32
    return %c0_i32, %c0_i32_0 : i32, i32
  }
  func.func @transform_5(%arg0: i32, %arg1: i32) -> (i32, i32) {
    %c0_i32 = arith.constant 0 : i32
    %c0_i32_0 = arith.constant 0 : i32
    return %arg0, %c0_i32 : i32, i32
  }
}

</mosaic_0001>

<llo_original>
// kernel: tpu_custom_call.1
$region0: #{tpu_custom_call.1}
  #allocation0 [shape = 'u32[]', space=smem, size = 0x4, offset = 0x4, fixed_abs, tag = 'smem constant byte address 0x4 - core index']
  #allocation1 [shape = 'u32[72,128]{1,0:T(1,128)}', space=vmem, size = 0x9000, scoped, tag = 'internal scratch']
  #allocation2 [shape = 'f32[128,128]{1,0:T(8,128)}', space=vmem, size = 0x10000, scoped, tag = 'scratch operand']
  %s0 = inlined_call_operand.hbm [shape: f32[128,128], index: 0, kind: input, shape index: {}]
  %s1 = inlined_call_operand.hbm [shape: bf16[128,512], index: 1, kind: input, shape index: {}]
  %s2 = inlined_call_operand.hbm [shape: f32[1,512], index: 2, kind: input, shape index: {}]
  %s3 = inlined_call_operand.hbm [shape: bf16[512,128], index: 3, kind: input, shape index: {}]
  %s4 = inlined_call_operand.vmem [shape: f32[1,128], index: 4, kind: input, shape index: {}]
  %s5 = inlined_call_operand.hbm [shape: f32[128,128], index: 5, kind: output, shape index: {}]
  %s6 = sld [smem:[#allocation0]]
  $region54: #{tpu_custom_call.1} parent=0
    _
  %s8 = ssub.s32 1, %s6
  %s9 = scalar_select 0, %s8, %s6
  $region1: #{tpu_custom_call.1} parent=0
    #allocation3 [shape = 'u8[65536]{0}', space=vmem, size = 0x10000, scoped, tag = 'input window, operand 0, single buffered']
    #allocation4 [shape = 's32[1]{0}', space=sflag, size = 0x4, scoped, tag = 'scoped memory for tpu_custom_call.1']
    #allocation5 [shape = 's32[1]{0}', space=sflag, size = 0x4, scoped, tag = 'scoped memory for tpu_custom_call.1']
    #allocation6 [shape = 'u8[131072]{0}', space=vmem, size = 0x20000, scoped, tag = 'input window, operand 1, single buffered']
    #allocation7 [shape = 's32[1]{0}', space=sflag, size = 0x4, scoped, tag = 'scoped memory for tpu_custom_call.1']
    #allocation8 [shape = 'u8[2048]{0}', space=vmem, size = 0x800, scoped, tag = 'input window, operand 2, single buffered']
    #allocation9 [shape = 'u8[131072]{0}', space=vmem, size = 0x20000, scoped, tag = 'input window, operand 3, single buffered']
    #allocation10 [shape = 's32[1]{0}', space=sflag, size = 0x4, scoped, tag = 'scoped memory for tpu_custom_call.1']
    #allocation11 [shape = 'u8[65536]{0}', space=vmem, size = 0x10000, scoped, tag = 'output window, operand 0, single buffered']
    %10 = vsyncpa [#allocation4], 0
    %11 = vsyncpa [#allocation7], 0
    %12 = vsyncpa [#allocation10], 0
    %13 = vsyncpa [#allocation5], 0
    // Predicated region
    $region2: #{tpu_custom_call.1} parent=1 // pred_check
      _
    $region3: #{tpu_custom_call.1} parent=1 // pred_check_branch
      %15 = sbr.rel (0) target = $region5
    $region4: #{tpu_custom_call.1} parent=1 // pred_region
      %17 = vsyncadd [#allocation4], 0
      %s18 = sshll.u32 %s0, 4
      %s19 = int_to_ptr.hbm [resolvable:$true] %s18
      %s20 = sshll.u32 [#allocation3], 4
      %s21 = int_to_ptr.vmem [resolvable:$true] %s20
      %26 = dma.hbm_to_vmem [thread:$0]  %s19, 2048, %s21, [#allocation4], 128, 128, 8
    $region5: #{tpu_custom_call.1} parent=1 // pred_fallthru
      _
    // Predicated region
    $region6: #{tpu_custom_call.1} parent=1 // pred_check
      _
    $region7: #{tpu_custom_call.1} parent=1 // pred_check_branch
      %28 = sbr.rel (0) target = $region9
    $region8: #{tpu_custom_call.1} parent=1 // pred_region
      %30 = vsyncadd [#allocation7], 0
      %s31 = sshll.u32 %s1, 4
      %s32 = int_to_ptr.hbm [resolvable:$true] %s31
      %s33 = sshll.u32 [#allocation6], 4
      %s34 = int_to_ptr.vmem [resolvable:$true] %s33
      %39 = dma.hbm_to_vmem [thread:$0]  %s32, 4096, %s34, [#allocation7], 256, 256, 16
    $region9: #{tpu_custom_call.1} parent=1 // pred_fallthru
      _
    // Predicated region
    $region10: #{tpu_custom_call.1} parent=1 // pred_check
      _
    $region11: #{tpu_custom_call.1} parent=1 // pred_check_branch
      %41 = sbr.rel (0) target = $region13
    $region12: #{tpu_custom_call.1} parent=1 // pred_region
      %43 = vsyncadd [#allocation7], 0
      %s45 = sshll.u32 %s2, 4
      %s46 = int_to_ptr.hbm [resolvable:$true] %s45
      %s47 = sshll.u32 [#allocation8], 4
      %s48 = int_to_ptr.vmem [resolvable:$true] %s47
      %50 = dma.hbm_to_vmem [thread:$0]  %s46, 64, %s48, [#allocation7]
    $region13: #{tpu_custom_call.1} parent=1 // pred_fallthru
      _
    // Predicated region
    $region14: #{tpu_custom_call.1} parent=1 // pred_check
      _
    $region15: #{tpu_custom_call.1} parent=1 // pred_check_branch
      %52 = sbr.rel (0) target = $region17
    $region16: #{tpu_custom_call.1} parent=1 // pred_region
      %54 = vsyncadd [#allocation10], 0
      %s55 = sshll.u32 %s3, 4
      %s56 = int_to_ptr.hbm [resolvable:$true] %s55
      %s57 = sshll.u32 [#allocation9], 4
      %s58 = int_to_ptr.vmem [resolvable:$true] %s57
      %63 = dma.hbm_to_vmem [thread:$0]  %s56, 4096, %s58, [#allocation10], 64, 64, 4
    $region17: #{tpu_custom_call.1} parent=1 // pred_fallthru
      _
    // Predicated region
    $region18: #{tpu_custom_call.1} parent=1 // pred_check
      _
    $region19: #{tpu_custom_call.1} parent=1 // pred_check_branch
      %65 = sbr.rel (0) target = $region21
    $region20: #{tpu_custom_call.1} parent=1 // pred_region
      _
    $region21: #{tpu_custom_call.1} parent=1 // pred_fallthru
      _
    // Predicated region
    $region22: #{tpu_custom_call.1} parent=1 // pred_check
      _
    $region23: #{tpu_custom_call.1} parent=1 // pred_check_branch
      %67 = sbr.rel (0) target = $region25
    $region24: #{tpu_custom_call.1} parent=1 // pred_region
      %69 = dma.done [#allocation4], 2048
    $region25: #{tpu_custom_call.1} parent=1 // pred_fallthru
      _
    // Predicated region
    $region26: #{tpu_custom_call.1} parent=1 // pred_check
      _
    $region27: #{tpu_custom_call.1} parent=1 // pred_check_branch
      %71 = sbr.rel (0) target = $region29
    $region28: #{tpu_custom_call.1} parent=1 // pred_region
      %73 = dma.done [#allocation7], 4096
    $region29: #{tpu_custom_call.1} parent=1 // pred_fallthru
      _
    // Predicated region
    $region30: #{tpu_custom_call.1} parent=1 // pred_check
      _
    $region31: #{tpu_custom_call.1} parent=1 // pred_check_branch
      %75 = sbr.rel (0) target = $region33
    $region32: #{tpu_custom_call.1} parent=1 // pred_region
      %77 = dma.done [#allocation7], 64
    $region33: #{tpu_custom_call.1} parent=1 // pred_fallthru
      _
    // Predicated region
    $region34: #{tpu_custom_call.1} parent=1 // pred_check
      _
    $region35: #{tpu_custom_call.1} parent=1 // pred_check_branch
      %79 = sbr.rel (0) target = $region37
    $region36: #{tpu_custom_call.1} parent=1 // pred_region
      %81 = dma.done [#allocation10], 4096
    $region37: #{tpu_custom_call.1} parent=1 // pred_fallthru
      _
    %p82 = scmp.eq.s32.totalorder 0, 0
    // Predicated region
    $region38: #{tpu_custom_call.1} parent=1 // pred_check
      %p83 = pneg %p82
    $region39: #{tpu_custom_call.1} parent=1 // pred_check_branch
      %85 = sbr.rel (%p83) target = $region41
    $region40: #{tpu_custom_call.1} parent=1 // pred_region
      %86 = vst [vmem:[#allocation2] sm:$0xff] 0.0
      %87 = vst [vmem:[#allocation2 + $0x8] sm:$0xff] 0.0
      %88 = vst [vmem:[#allocation2 + $0x10] sm:$0xff] 0.0
      %89 = vst [vmem:[#allocation2 + $0x18] sm:$0xff] 0.0
      %90 = vst [vmem:[#allocation2 + $0x20] sm:$0xff] 0.0
      %91 = vst [vmem:[#allocation2 + $0x28] sm:$0xff] 0.0
      %92 = vst [vmem:[#allocation2 + $0x30] sm:$0xff] 0.0
      %93 = vst [vmem:[#allocation2 + $0x38] sm:$0xff] 0.0
      %94 = vst [vmem:[#allocation2 + $0x40] sm:$0xff] 0.0
      %95 = vst [vmem:[#allocation2 + $0x48] sm:$0xff] 0.0
      %96 = vst [vmem:[#allocation2 + $0x50] sm:$0xff] 0.0
      %97 = vst [vmem:[#allocation2 + $0x58] sm:$0xff] 0.0
      %98 = vst [vmem:[#allocation2 + $0x60] sm:$0xff] 0.0
      %99 = vst [vmem:[#allocation2 + $0x68] sm:$0xff] 0.0
      %100 = vst [vmem:[#allocation2 + $0x70] sm:$0xff] 0.0
      %101 = vst [vmem:[#allocation2 + $0x78] sm:$0xff] 0.0
    $region41: #{tpu_custom_call.1} parent=1 // pred_fallthru
      _
    %v102 = vld [vmem:[#allocation3] sm:$0xff]
    %v103 = vld [vmem:[#allocation3 + $0x8] sm:$0xff]
    %v104 = vld [vmem:[#allocation3 + $0x10] sm:$0xff]
    %v105 = vld [vmem:[#allocation3 + $0x18] sm:$0xff]
    %v106 = vld [vmem:[#allocation3 + $0x20] sm:$0xff]
    %v107 = vld [vmem:[#allocation3 + $0x28] sm:$0xff]
    %v108 = vld [vmem:[#allocation3 + $0x30] sm:$0xff]
    %v109 = vld [vmem:[#allocation3 + $0x38] sm:$0xff]
    %v110 = vld [vmem:[#allocation3 + $0x40] sm:$0xff]
    %v111 = vld [vmem:[#allocation3 + $0x48] sm:$0xff]
    %v112 = vld [vmem:[#allocation3 + $0x50] sm:$0xff]
    %v113 = vld [vmem:[#allocation3 + $0x58] sm:$0xff]
    %v114 = vld [vmem:[#allocation3 + $0x60] sm:$0xff]
    %v115 = vld [vmem:[#allocation3 + $0x68] sm:$0xff]
    %v116 = vld [vmem:[#allocation3 + $0x70] sm:$0xff]
    %v117 = vld [vmem:[#allocation3 + $0x78] sm:$0xff]
    %v118 = vpack.c.bf16 %v103, %v102
    %v119 = vpack.c.bf16 %v105, %v104
    %v120 = vpack.c.bf16 %v107, %v106
    %v121 = vpack.c.bf16 %v109, %v108
    %v122 = vpack.c.bf16 %v111, %v110
    %v123 = vpack.c.bf16 %v113, %v112
    %v124 = vpack.c.bf16 %v115, %v114
    %v125 = vpack.c.bf16 %v117, %v116
    %v126 = vld [vmem:[#allocation6] sm:$0xff]
    %v127 = vld [vmem:[#allocation6 + $0x8] sm:$0xff]
    %v128 = vld [vmem:[#allocation6 + $0x10] sm:$0xff]
    %v129 = vld [vmem:[#allocation6 + $0x18] sm:$0xff]
    %v130 = vld [vmem:[#allocation6 + $0x20] sm:$0xff]
    %v131 = vld [vmem:[#allocation6 + $0x28] sm:$0xff]
    %v132 = vld [vmem:[#allocation6 + $0x30] sm:$0xff]
    %v133 = vld [vmem:[#allocation6 + $0x38] sm:$0xff]
    %v134 = vld [vmem:[#allocation6 + $0x40] sm:$0xff]
    %v135 = vld [vmem:[#allocation6 + $0x48] sm:$0xff]
    %v136 = vld [vmem:[#allocation6 + $0x50] sm:$0xff]
    %v137 = vld [vmem:[#allocation6 + $0x58] sm:$0xff]
    %v138 = vld [vmem:[#allocation6 + $0x60] sm:$0xff]
    %v139 = vld [vmem:[#allocation6 + $0x68] sm:$0xff]
    %v140 = vld [vmem:[#allocation6 + $0x70] sm:$0xff]
    %v141 = vld [vmem:[#allocation6 + $0x78] sm:$0xff]
    %v142 = vld [vmem:[#allocation6 + $0x80] sm:$0xff]
    %v143 = vld [vmem:[#allocation6 + $0x88] sm:$0xff]
    %v144 = vld [vmem:[#allocation6 + $0x90] sm:$0xff]
    %v145 = vld [vmem:[#allocation6 + $0x98] sm:$0xff]
    %v146 = vld [vmem:[#allocation6 + $0xa0] sm:$0xff]
    %v147 = vld [vmem:[#allocation6 + $0xa8] sm:$0xff]
    %v148 = vld [vmem:[#allocation6 + $0xb0] sm:$0xff]
    %v149 = vld [vmem:[#allocation6 + $0xb8] sm:$0xff]
    %v150 = vld [vmem:[#allocation6 + $0xc0] sm:$0xff]
    %v151 = vld [vmem:[#allocation6 + $0xc8] sm:$0xff]
    %v152 = vld [vmem:[#allocation6 + $0xd0] sm:$0xff]
    %v153 = vld [vmem:[#allocation6 + $0xd8] sm:$0xff]
    %v154 = vld [vmem:[#allocation6 + $0xe0] sm:$0xff]
    %v155 = vld [vmem:[#allocation6 + $0xe8] sm:$0xff]
    %v156 = vld [vmem:[#allocation6 + $0xf0] sm:$0xff]
    %v157 = vld [vmem:[#allocation6 + $0xf8] sm:$0xff]
    %v158 = vld [vmem:[#allocation8] sm:$0xf]
    %v160 = vperm.slane %v158, 0
    %v161 = vperm.slane %v158, 1
    %v162 = vperm.slane %v158, 2
    %v163 = vperm.slane %v158, 3
    %v200 = vunpack.c.l.b16 %v126
    %v201 = vunpack.c.h.b16 %v126
    %v202 = vunpack.c.l.b16 %v127
    %v203 = vunpack.c.h.b16 %v127
    %v204 = vunpack.c.l.b16 %v128
    %v205 = vunpack.c.h.b16 %v128
    %v206 = vunpack.c.l.b16 %v129
    %v207 = vunpack.c.h.b16 %v129
    %v208 = vunpack.c.l.b16 %v130
    %v209 = vunpack.c.h.b16 %v130
    %v210 = vunpack.c.l.b16 %v131
    %v211 = vunpack.c.h.b16 %v131
    %v212 = vunpack.c.l.b16 %v132
    %v213 = vunpack.c.h.b16 %v132
    %v214 = vunpack.c.l.b16 %v133
    %v215 = vunpack.c.h.b16 %v133
    %v216 = vunpack.c.l.b16 %v134
    %v217 = vunpack.c.h.b16 %v134
    %v218 = vunpack.c.l.b16 %v135
    %v219 = vunpack.c.h.b16 %v135
    %v220 = vunpack.c.l.b16 %v136
    %v221 = vunpack.c.h.b16 %v136
    %v222 = vunpack.c.l.b16 %v137
    %v223 = vunpack.c.h.b16 %v137
    %v224 = vunpack.c.l.b16 %v138
    %v225 = vunpack.c.h.b16 %v138
    %v226 = vunpack.c.l.b16 %v139
    %v227 = vunpack.c.h.b16 %v139
    %v228 = vunpack.c.l.b16 %v140
    %v229 = vunpack.c.h.b16 %v140
    %v230 = vunpack.c.l.b16 %v141
    %v231 = vunpack.c.h.b16 %v141
    %v232 = vunpack.c.l.b16 %v142
    %v233 = vunpack.c.h.b16 %v142
    %v234 = vunpack.c.l.b16 %v143
    %v235 = vunpack.c.h.b16 %v143
    %v236 = vunpack.c.l.b16 %v144
    %v237 = vunpack.c.h.b16 %v144
    %v238 = vunpack.c.l.b16 %v145
    %v239 = vunpack.c.h.b16 %v145
    %v240 = vunpack.c.l.b16 %v146
    %v241 = vunpack.c.h.b16 %v146
    %v242 = vunpack.c.l.b16 %v147
    %v243 = vunpack.c.h.b16 %v147
    %v244 = vunpack.c.l.b16 %v148
    %v245 = vunpack.c.h.b16 %v148
    %v246 = vunpack.c.l.b16 %v149
    %v247 = vunpack.c.h.b16 %v149
    %v248 = vunpack.c.l.b16 %v150
    %v249 = vunpack.c.h.b16 %v150
    %v250 = vunpack.c.l.b16 %v151
    %v251 = vunpack.c.h.b16 %v151
    %v252 = vunpack.c.l.b16 %v152
    %v253 = vunpack.c.h.b16 %v152
    %v254 = vunpack.c.l.b16 %v153
    %v255 = vunpack.c.h.b16 %v153
    %v256 = vunpack.c.l.b16 %v154
    %v257 = vunpack.c.h.b16 %v154
    %v258 = vunpack.c.l.b16 %v155
    %v259 = vunpack.c.h.b16 %v155
    %v260 = vunpack.c.l.b16 %v156
    %v261 = vunpack.c.h.b16 %v156
    %v262 = vunpack.c.l.b16 %v157
    %v263 = vunpack.c.h.b16 %v157
    %v264 = vpack.c.b16 %v204, %v200
    %v265 = vpack.c.b16 %v205, %v201
    %v266 = vpack.c.b16 %v206, %v202
    %v267 = vpack.c.b16 %v207, %v203
    %v268 = vpack.c.b16 %v212, %v208
    %v269 = vpack.c.b16 %v213, %v209
    %v270 = vpack.c.b16 %v214, %v210
    %v271 = vpack.c.b16 %v215, %v211
    %v272 = vpack.c.b16 %v220, %v216
    %v273 = vpack.c.b16 %v221, %v217
    %v274 = vpack.c.b16 %v222, %v218
    %v275 = vpack.c.b16 %v223, %v219
    %v276 = vpack.c.b16 %v228, %v224
    %v277 = vpack.c.b16 %v229, %v225
    %v278 = vpack.c.b16 %v230, %v226
    %v279 = vpack.c.b16 %v231, %v227
    %v280 = vpack.c.b16 %v236, %v232
    %v281 = vpack.c.b16 %v237, %v233
    %v282 = vpack.c.b16 %v238, %v234
    %v283 = vpack.c.b16 %v239, %v235
    %v284 = vpack.c.b16 %v244, %v240
    %v285 = vpack.c.b16 %v245, %v241
    %v286 = vpack.c.b16 %v246, %v242
    %v287 = vpack.c.b16 %v247, %v243
    %v288 = vpack.c.b16 %v252, %v248
    %v289 = vpack.c.b16 %v253, %v249
    %v290 = vpack.c.b16 %v254, %v250
    %v291 = vpack.c.b16 %v255, %v251
    %v292 = vpack.c.b16 %v260, %v256
    %v293 = vpack.c.b16 %v261, %v257
    %v294 = vpack.c.b16 %v262, %v258
    %v295 = vpack.c.b16 %v263, %v259
    %328 = vmatpush.bf16.msra.mxu0 %v292
    %329 = vmatpush.bf16.msra.mxu0 %v288
    %330 = vmatpush.bf16.msra.mxu0 %v284
    %331 = vmatpush.bf16.msra.mxu0 %v280
    %332 = vmatpush.bf16.msra.mxu0 %v276
    %333 = vmatpush.bf16.msra.mxu0 %v272
    %334 = vmatpush.bf16.msra.mxu0 %v268
    %335 = vmatpush.bf16.msra.mxu0 %v264
    %336 = vmatmul.bf16.gmra.mxu0 %v118
    %v337 = vpop.f32.mrf.mxu0
    %v338 = vadd.f32 %v160, %v337
    %v339 = vpop.f32.mrf.mxu0
    %v340 = vadd.f32 %v160, %v339
    %341 = vmatmul.bf16.gmra.mxu0 %v119
    %v342 = vpop.f32.mrf.mxu0
    %v343 = vadd.f32 %v160, %v342
    %v344 = vpop.f32.mrf.mxu0
    %v345 = vadd.f32 %v160, %v344
    %346 = vmatmul.bf16.gmra.mxu0 %v120
    %v347 = vpop.f32.mrf.mxu0
    %v348 = vadd.f32 %v160, %v347
    %v349 = vpop.f32.mrf.mxu0
    %v350 = vadd.f32 %v160, %v349
    %351 = vmatmul.bf16.gmra.mxu0 %v121
    %v352 = vpop.f32.mrf.mxu0
    %v353 = vadd.f32 %v160, %v352
    %v354 = vpop.f32.mrf.mxu0
    %v355 = vadd.f32 %v160, %v354
    %356 = vmatmul.bf16.gmra.mxu0 %v122
    %v357 = vpop.f32.mrf.mxu0
    %v358 = vadd.f32 %v160, %v357
    %v359 = vpop.f32.mrf.mxu0
    %v360 = vadd.f32 %v160, %v359
    %361 = vmatmul.bf16.gmra.mxu0 %v123
    %v362 = vpop.f32.mrf.mxu0
    %v363 = vadd.f32 %v160, %v362
    %v364 = vpop.f32.mrf.mxu0
    %v365 = vadd.f32 %v160, %v364
    %366 = vmatmul.bf16.gmra.mxu0 %v124
    %v367 = vpop.f32.mrf.mxu0
    %v368 = vadd.f32 %v160, %v367
    %v369 = vpop.f32.mrf.mxu0
    %v370 = vadd.f32 %v160, %v369
    %371 = vmatmul.bf16.gmra.mxu0 %v125
    %v372 = vpop.f32.mrf.mxu0
    %v373 = vadd.f32 %v160, %v372
    %v374 = vpop.f32.mrf.mxu0
    %v375 = vadd.f32 %v160, %v374
    %376 = vdwg.mxu0
    %377 = vmatpush.bf16.msra.mxu0 %v293
    %378 = vmatpush.bf16.msra.mxu0 %v289
    %379 = vmatpush.bf16.msra.mxu0 %v285
    %380 = vmatpush.bf16.msra.mxu0 %v281
    %381 = vmatpush.bf16.msra.mxu0 %v277
    %382 = vmatpush.bf16.msra.mxu0 %v273
    %383 = vmatpush.bf16.msra.mxu0 %v269
    %384 = vmatpush.bf16.msra.mxu0 %v265
    %385 = vmatmul.bf16.gmra.mxu0 %v118
    %v386 = vpop.f32.mrf.mxu0
    %v387 = vadd.f32 %v161, %v386
    %v388 = vpop.f32.mrf.mxu0
    %v389 = vadd.f32 %v161, %v388
    %390 = vmatmul.bf16.gmra.mxu0 %v119
    %v391 = vpop.f32.mrf.mxu0
    %v392 = vadd.f32 %v161, %v391
    %v393 = vpop.f32.mrf.mxu0
    %v394 = vadd.f32 %v161, %v393
    %395 = vmatmul.bf16.gmra.mxu0 %v120
    %v396 = vpop.f32.mrf.mxu0
    %v397 = vadd.f32 %v161, %v396
    %v398 = vpop.f32.mrf.mxu0
    %v399 = vadd.f32 %v161, %v398
    %400 = vmatmul.bf16.gmra.mxu0 %v121
    %v401 = vpop.f32.mrf.mxu0
    %v402 = vadd.f32 %v161, %v401
    %v403 = vpop.f32.mrf.mxu0
    %v404 = vadd.f32 %v161, %v403
    %405 = vmatmul.bf16.gmra.mxu0 %v122
    %v406 = vpop.f32.mrf.mxu0
    %v407 = vadd.f32 %v161, %v406
    %v408 = vpop.f32.mrf.mxu0
    %v409 = vadd.f32 %v161, %v408
    %410 = vmatmul.bf16.gmra.mxu0 %v123
    %v411 = vpop.f32.mrf.mxu0
    %v412 = vadd.f32 %v161, %v411
    %v413 = vpop.f32.mrf.mxu0
    %v414 = vadd.f32 %v161, %v413
    %415 = vmatmul.bf16.gmra.mxu0 %v124
    %v416 = vpop.f32.mrf.mxu0
    %v417 = vadd.f32 %v161, %v416
    %v418 = vpop.f32.mrf.mxu0
    %v419 = vadd.f32 %v161, %v418
    %420 = vmatmul.bf16.gmra.mxu0 %v125
    %v421 = vpop.f32.mrf.mxu0
    %v422 = vadd.f32 %v161, %v421
    %v423 = vpop.f32.mrf.mxu0
    %v424 = vadd.f32 %v161, %v423
    %425 = vdwg.mxu0
    %426 = vmatpush.bf16.msra.mxu0 %v294
    %427 = vmatpush.bf16.msra.mxu0 %v290
    %428 = vmatpush.bf16.msra.mxu0 %v286
    %429 = vmatpush.bf16.msra.mxu0 %v282
    %430 = vmatpush.bf16.msra.mxu0 %v278
    %431 = vmatpush.bf16.msra.mxu0 %v274
    %432 = vmatpush.bf16.msra.mxu0 %v270
    %433 = vmatpush.bf16.msra.mxu0 %v266
    %434 = vmatmul.bf16.gmra.mxu0 %v118
    %v435 = vpop.f32.mrf.mxu0
    %v436 = vadd.f32 %v162, %v435
    %v437 = vpop.f32.mrf.mxu0
    %v438 = vadd.f32 %v162, %v437
    %439 = vmatmul.bf16.gmra.mxu0 %v119
    %v440 = vpop.f32.mrf.mxu0
    %v441 = vadd.f32 %v162, %v440
    %v442 = vpop.f32.mrf.mxu0
    %v443 = vadd.f32 %v162, %v442
    %444 = vmatmul.bf16.gmra.mxu0 %v120
    %v445 = vpop.f32.mrf.mxu0
    %v446 = vadd.f32 %v162, %v445
    %v447 = vpop.f32.mrf.mxu0
    %v448 = vadd.f32 %v162, %v447
    %449 = vmatmul.bf16.gmra.mxu0 %v121
    %v450 = vpop.f32.mrf.mxu0
    %v451 = vadd.f32 %v162, %v450
    %v452 = vpop.f32.mrf.mxu0
    %v453 = vadd.f32 %v162, %v452
    %454 = vmatmul.bf16.gmra.mxu0 %v122
    %v455 = vpop.f32.mrf.mxu0
    %v456 = vadd.f32 %v162, %v455
    %v457 = vpop.f32.mrf.mxu0
    %v458 = vadd.f32 %v162, %v457
    %459 = vmatmul.bf16.gmra.mxu0 %v123
    %v460 = vpop.f32.mrf.mxu0
    %v461 = vadd.f32 %v162, %v460
    %v462 = vpop.f32.mrf.mxu0
    %v463 = vadd.f32 %v162, %v462
    %464 = vmatmul.bf16.gmra.mxu0 %v124
    %v465 = vpop.f32.mrf.mxu0
    %v466 = vadd.f32 %v162, %v465
    %v467 = vpop.f32.mrf.mxu0
    %v468 = vadd.f32 %v162, %v467
    %469 = vmatmul.bf16.gmra.mxu0 %v125
    %v470 = vpop.f32.mrf.mxu0
    %v471 = vadd.f32 %v162, %v470
    %v472 = vpop.f32.mrf.mxu0
    %v473 = vadd.f32 %v162, %v472
    %474 = vdwg.mxu0
    %475 = vmatpush.bf16.msra.mxu0 %v295
    %476 = vmatpush.bf16.msra.mxu0 %v291
    %477 = vmatpush.bf16.msra.mxu0 %v287
    %478 = vmatpush.bf16.msra.mxu0 %v283
    %479 = vmatpush.bf16.msra.mxu0 %v279
    %480 = vmatpush.bf16.msra.mxu0 %v275
    %481 = vmatpush.bf16.msra.mxu0 %v271
    %482 = vmatpush.bf16.msra.mxu0 %v267
    %483 = vmatmul.bf16.gmra.mxu0 %v118
    %v484 = vpop.f32.mrf.mxu0
    %v485 = vadd.f32 %v163, %v484
    %v486 = vpop.f32.mrf.mxu0
    %v487 = vadd.f32 %v163, %v486
    %488 = vmatmul.bf16.gmra.mxu0 %v119
    %v489 = vpop.f32.mrf.mxu0
    %v490 = vadd.f32 %v163, %v489
    %v491 = vpop.f32.mrf.mxu0
    %v492 = vadd.f32 %v163, %v491
    %493 = vmatmul.bf16.gmra.mxu0 %v120
    %v494 = vpop.f32.mrf.mxu0
    %v495 = vadd.f32 %v163, %v494
    %v496 = vpop.f32.mrf.mxu0
    %v497 = vadd.f32 %v163, %v496
    %498 = vmatmul.bf16.gmra.mxu0 %v121
    %v499 = vpop.f32.mrf.mxu0
    %v500 = vadd.f32 %v163, %v499
    %v501 = vpop.f32.mrf.mxu0
    %v502 = vadd.f32 %v163, %v501
    %503 = vmatmul.bf16.gmra.mxu0 %v122
    %v504 = vpop.f32.mrf.mxu0
    %v505 = vadd.f32 %v163, %v504
    %v506 = vpop.f32.mrf.mxu0
    %v507 = vadd.f32 %v163, %v506
    %508 = vmatmul.bf16.gmra.mxu0 %v123
    %v509 = vpop.f32.mrf.mxu0
    %v510 = vadd.f32 %v163, %v509
    %v511 = vpop.f32.mrf.mxu0
    %v512 = vadd.f32 %v163, %v511
    %513 = vmatmul.bf16.gmra.mxu0 %v124
    %v514 = vpop.f32.mrf.mxu0
    %v515 = vadd.f32 %v163, %v514
    %v516 = vpop.f32.mrf.mxu0
    %v517 = vadd.f32 %v163, %v516
    %518 = vmatmul.bf16.gmra.mxu0 %v125
    %v519 = vpop.f32.mrf.mxu0
    %v520 = vadd.f32 %v163, %v519
    %v521 = vpop.f32.mrf.mxu0
    %v522 = vadd.f32 %v163, %v521
    %523 = vdwg.mxu0
    %v524 = vmul.f32 %v338, 0.044715
    %v525 = vmul.f32 %v387, 0.044715
    %v526 = vmul.f32 %v436, 0.044715
    %v527 = vmul.f32 %v485, 0.044715
    %v528 = vmul.f32 %v340, 0.044715
    %v529 = vmul.f32 %v389, 0.044715
    %v530 = vmul.f32 %v438, 0.044715
    %v531 = vmul.f32 %v487, 0.044715
    %v532 = vmul.f32 %v343, 0.044715
    %v533 = vmul.f32 %v392, 0.044715
    %v534 = vmul.f32 %v441, 0.044715
    %v535 = vmul.f32 %v490, 0.044715
    %v536 = vmul.f32 %v345, 0.044715
    %v537 = vmul.f32 %v394, 0.044715
    %v538 = vmul.f32 %v443, 0.044715
    %v539 = vmul.f32 %v492, 0.044715
    %v540 = vmul.f32 %v348, 0.044715
    %v541 = vmul.f32 %v397, 0.044715
    %v542 = vmul.f32 %v446, 0.044715
    %v543 = vmul.f32 %v495, 0.044715
    %v544 = vmul.f32 %v350, 0.044715
    %v545 = vmul.f32 %v399, 0.044715
    %v546 = vmul.f32 %v448, 0.044715
    %v547 = vmul.f32 %v497, 0.044715
    %v548 = vmul.f32 %v353, 0.044715
    %v549 = vmul.f32 %v402, 0.044715
    %v550 = vmul.f32 %v451, 0.044715
    %v551 = vmul.f32 %v500, 0.044715
    %v552 = vmul.f32 %v355, 0.044715
    %v553 = vmul.f32 %v404, 0.044715
    %v554 = vmul.f32 %v453, 0.044715
    %v555 = vmul.f32 %v502, 0.044715
    %v556 = vmul.f32 %v358, 0.044715
    %v557 = vmul.f32 %v407, 0.044715
    %v558 = vmul.f32 %v456, 0.044715
    %v559 = vmul.f32 %v505, 0.044715
    %v560 = vmul.f32 %v360, 0.044715
    %v561 = vmul.f32 %v409, 0.044715
    %v562 = vmul.f32 %v458, 0.044715
    %v563 = vmul.f32 %v507, 0.044715
    %v564 = vmul.f32 %v363, 0.044715
    %v565 = vmul.f32 %v412, 0.044715
    %v566 = vmul.f32 %v461, 0.044715
    %v567 = vmul.f32 %v510, 0.044715
    %v568 = vmul.f32 %v365, 0.044715
    %v569 = vmul.f32 %v414, 0.044715
    %v570 = vmul.f32 %v463, 0.044715
    %v571 = vmul.f32 %v512, 0.044715
    %v572 = vmul.f32 %v368, 0.044715
    %v573 = vmul.f32 %v417, 0.044715
    %v574 = vmul.f32 %v466, 0.044715
    %v575 = vmul.f32 %v515, 0.044715
    %v576 = vmul.f32 %v370, 0.044715
    %v577 = vmul.f32 %v419, 0.044715
    %v578 = vmul.f32 %v468, 0.044715
    %v579 = vmul.f32 %v517, 0.044715
    %v580 = vmul.f32 %v373, 0.044715
    %v581 = vmul.f32 %v422, 0.044715
    %v582 = vmul.f32 %v471, 0.044715
    %v583 = vmul.f32 %v520, 0.044715
    %v584 = vmul.f32 %v375, 0.044715
    %v585 = vmul.f32 %v424, 0.044715
    %v586 = vmul.f32 %v473, 0.044715
    %v587 = vmul.f32 %v522, 0.044715
    %v588 = vmul.f32 %v524, %v338
    %v589 = vmul.f32 %v525, %v387
    %v590 = vmul.f32 %v526, %v436
    %v591 = vmul.f32 %v527, %v485
    %v592 = vmul.f32 %v528, %v340
    %v593 = vmul.f32 %v529, %v389
    %v594 = vmul.f32 %v530, %v438
    %v595 = vmul.f32 %v531, %v487
    %v596 = vmul.f32 %v532, %v343
    %v597 = vmul.f32 %v533, %v392
    %v598 = vmul.f32 %v534, %v441
    %v599 = vmul.f32 %v535, %v490
    %v600 = vmul.f32 %v536, %v345
    %v601 = vmul.f32 %v537, %v394
    %v602 = vmul.f32 %v538, %v443
    %v603 = vmul.f32 %v539, %v492
    %v604 = vmul.f32 %v540, %v348
    %v605 = vmul.f32 %v541, %v397
    %v606 = vmul.f32 %v542, %v446
    %v607 = vmul.f32 %v543, %v495
    %v608 = vmul.f32 %v544, %v350
    %v609 = vmul.f32 %v545, %v399
    %v610 = vmul.f32 %v546, %v448
    %v611 = vmul.f32 %v547, %v497
    %v612 = vmul.f32 %v548, %v353
    %v613 = vmul.f32 %v549, %v402
    %v614 = vmul.f32 %v550, %v451
    %v615 = vmul.f32 %v551, %v500
    %v616 = vmul.f32 %v552, %v355
    %v617 = vmul.f32 %v553, %v404
    %v618 = vmul.f32 %v554, %v453
    %v619 = vmul.f32 %v555, %v502
    %v620 = vmul.f32 %v556, %v358
    %v621 = vmul.f32 %v557, %v407
    %v622 = vmul.f32 %v558, %v456
    %v623 = vmul.f32 %v559, %v505
    %v624 = vmul.f32 %v560, %v360
    %v625 = vmul.f32 %v561, %v409
    %v626 = vmul.f32 %v562, %v458
    %v627 = vmul.f32 %v563, %v507
    %v628 = vmul.f32 %v564, %v363
    %v629 = vmul.f32 %v565, %v412
    %v630 = vmul.f32 %v566, %v461
    %v631 = vmul.f32 %v567, %v510
    %v632 = vmul.f32 %v568, %v365
    %v633 = vmul.f32 %v569, %v414
    %v634 = vmul.f32 %v570, %v463
    %v635 = vmul.f32 %v571, %v512
    %v636 = vmul.f32 %v572, %v368
    %v637 = vmul.f32 %v573, %v417
    %v638 = vmul.f32 %v574, %v466
    %v639 = vmul.f32 %v575, %v515
    %v640 = vmul.f32 %v576, %v370
    %v641 = vmul.f32 %v577, %v419
    %v642 = vmul.f32 %v578, %v468
    %v643 = vmul.f32 %v579, %v517
    %v644 = vmul.f32 %v580, %v373
    %v645 = vmul.f32 %v581, %v422
    %v646 = vmul.f32 %v582, %v471
    %v647 = vmul.f32 %v583, %v520
    %v648 = vmul.f32 %v584, %v375
    %v649 = vmul.f32 %v585, %v424
    %v650 = vmul.f32 %v586, %v473
    %v651 = vmul.f32 %v587, %v522
    %v652 = vmul.f32 %v588, %v338
    %v653 = vmul.f32 %v589, %v387
    %v654 = vmul.f32 %v590, %v436
    %v655 = vmul.f32 %v591, %v485
    %v656 = vmul.f32 %v592, %v340
    %v657 = vmul.f32 %v593, %v389
    %v658 = vmul.f32 %v594, %v438
    %v659 = vmul.f32 %v595, %v487
    %v660 = vmul.f32 %v596, %v343
    %v661 = vmul.f32 %v597, %v392
    %v662 = vmul.f32 %v598, %v441
    %v663 = vmul.f32 %v599, %v490
    %v664 = vmul.f32 %v600, %v345
    %v665 = vmul.f32 %v601, %v394
    %v666 = vmul.f32 %v602, %v443
    %v667 = vmul.f32 %v603, %v492
    %v668 = vmul.f32 %v604, %v348
    %v669 = vmul.f32 %v605, %v397
    %v670 = vmul.f32 %v606, %v446
    %v671 = vmul.f32 %v607, %v495
    %v672 = vmul.f32 %v608, %v350
    %v673 = vmul.f32 %v609, %v399
    %v674 = vmul.f32 %v610, %v448
    %v675 = vmul.f32 %v611, %v497
    %v676 = vmul.f32 %v612, %v353
    %v677 = vmul.f32 %v613, %v402
    %v678 = vmul.f32 %v614, %v451
    %v679 = vmul.f32 %v615, %v500
    %v680 = vmul.f32 %v616, %v355
    %v681 = vmul.f32 %v617, %v404
    %v682 = vmul.f32 %v618, %v453
    %v683 = vmul.f32 %v619, %v502
    %v684 = vmul.f32 %v620, %v358
    %v685 = vmul.f32 %v621, %v407
    %v686 = vmul.f32 %v622, %v456
    %v687 = vmul.f32 %v623, %v505
    %v688 = vmul.f32 %v624, %v360
    %v689 = vmul.f32 %v625, %v409
    %v690 = vmul.f32 %v626, %v458
    %v691 = vmul.f32 %v627, %v507
    %v692 = vmul.f32 %v628, %v363
    %v693 = vmul.f32 %v629, %v412
    %v694 = vmul.f32 %v630, %v461
    %v695 = vmul.f32 %v631, %v510
    %v696 = vmul.f32 %v632, %v365
    %v697 = vmul.f32 %v633, %v414
    %v698 = vmul.f32 %v634, %v463
    %v699 = vmul.f32 %v635, %v512
    %v700 = vmul.f32 %v636, %v368
    %v701 = vmul.f32 %v637, %v417
    %v702 = vmul.f32 %v638, %v466
    %v703 = vmul.f32 %v639, %v515
    %v704 = vmul.f32 %v640, %v370
    %v705 = vmul.f32 %v641, %v419
    %v706 = vmul.f32 %v642, %v468
    %v707 = vmul.f32 %v643, %v517
    %v708 = vmul.f32 %v644, %v373
    %v709 = vmul.f32 %v645, %v422
    %v710 = vmul.f32 %v646, %v471
    %v711 = vmul.f32 %v647, %v520
    %v712 = vmul.f32 %v648, %v375
    %v713 = vmul.f32 %v649, %v424
    %v714 = vmul.f32 %v650, %v473
    %v715 = vmul.f32 %v651, %v522
    %v716 = vadd.f32 %v338, %v652
    %v717 = vadd.f32 %v387, %v653
    %v718 = vadd.f32 %v436, %v654
    %v719 = vadd.f32 %v485, %v655
    %v720 = vadd.f32 %v340, %v656
    %v721 = vadd.f32 %v389, %v657
    %v722 = vadd.f32 %v438, %v658
    %v723 = vadd.f32 %v487, %v659
    %v724 = vadd.f32 %v343, %v660
    %v725 = vadd.f32 %v392, %v661
    %v726 = vadd.f32 %v441, %v662
    %v727 = vadd.f32 %v490, %v663
    %v728 = vadd.f32 %v345, %v664
    %v729 = vadd.f32 %v394, %v665
    %v730 = vadd.f32 %v443, %v666
    %v731 = vadd.f32 %v492, %v667
    %v732 = vadd.f32 %v348, %v668
    %v733 = vadd.f32 %v397, %v669
    %v734 = vadd.f32 %v446, %v670
    %v735 = vadd.f32 %v495, %v671
    %v736 = vadd.f32 %v350, %v672
    %v737 = vadd.f32 %v399, %v673
    %v738 = vadd.f32 %v448, %v674
    %v739 = vadd.f32 %v497, %v675
    %v740 = vadd.f32 %v353, %v676
    %v741 = vadd.f32 %v402, %v677
    %v742 = vadd.f32 %v451, %v678
    %v743 = vadd.f32 %v500, %v679
    %v744 = vadd.f32 %v355, %v680
    %v745 = vadd.f32 %v404, %v681
    %v746 = vadd.f32 %v453, %v682
    %v747 = vadd.f32 %v502, %v683
    %v748 = vadd.f32 %v358, %v684
    %v749 = vadd.f32 %v407, %v685
    %v750 = vadd.f32 %v456, %v686
    %v751 = vadd.f32 %v505, %v687
    %v752 = vadd.f32 %v360, %v688
    %v753 = vadd.f32 %v409, %v689
    %v754 = vadd.f32 %v458, %v690
    %v755 = vadd.f32 %v507, %v691
    %v756 = vadd.f32 %v363, %v692
    %v757 = vadd.f32 %v412, %v693
    %v758 = vadd.f32 %v461, %v694
    %v759 = vadd.f32 %v510, %v695
    %v760 = vadd.f32 %v365, %v696
    %v761 = vadd.f32 %v414, %v697
    %v762 = vadd.f32 %v463, %v698
    %v763 = vadd.f32 %v512, %v699
    %v764 = vadd.f32 %v368, %v700
    %v765 = vadd.f32 %v417, %v701
    %v766 = vadd.f32 %v466, %v702
    %v767 = vadd.f32 %v515, %v703
    %v768 = vadd.f32 %v370, %v704
    %v769 = vadd.f32 %v419, %v705
    %v770 = vadd.f32 %v468, %v706
    %v771 = vadd.f32 %v517, %v707
    %v772 = vadd.f32 %v373, %v708
    %v773 = vadd.f32 %v422, %v709
    %v774 = vadd.f32 %v471, %v710
    %v775 = vadd.f32 %v520, %v711
    %v776 = vadd.f32 %v375, %v712
    %v777 = vadd.f32 %v424, %v713
    %v778 = vadd.f32 %v473, %v714
    %v779 = vadd.f32 %v522, %v715
    %v780 = vmul.f32 %v716, 0.7978846
    %v781 = vmul.f32 %v717, 0.7978846
    %v782 = vmul.f32 %v718, 0.7978846
    %v783 = vmul.f32 %v719, 0.7978846
    %v784 = vmul.f32 %v720, 0.7978846
    %v785 = vmul.f32 %v721, 0.7978846
    %v786 = vmul.f32 %v722, 0.7978846
    %v787 = vmul.f32 %v723, 0.7978846
    %v788 = vmul.f32 %v724, 0.7978846
    %v789 = vmul.f32 %v725, 0.7978846
    %v790 = vmul.f32 %v726, 0.7978846
    %v791 = vmul.f32 %v727, 0.7978846
    %v792 = vmul.f32 %v728, 0.7978846
    %v793 = vmul.f32 %v729, 0.7978846
    %v794 = vmul.f32 %v730, 0.7978846
    %v795 = vmul.f32 %v731, 0.7978846
    %v796 = vmul.f32 %v732, 0.7978846
    %v797 = vmul.f32 %v733, 0.7978846
    %v798 = vmul.f32 %v734, 0.7978846
    %v799 = vmul.f32 %v735, 0.7978846
    %v800 = vmul.f32 %v736, 0.7978846
    %v801 = vmul.f32 %v737, 0.7978846
    %v802 = vmul.f32 %v738, 0.7978846
    %v803 = vmul.f32 %v739, 0.7978846
    %v804 = vmul.f32 %v740, 0.7978846
    %v805 = vmul.f32 %v741, 0.7978846
    %v806 = vmul.f32 %v742, 0.7978846
    %v807 = vmul.f32 %v743, 0.7978846
    %v808 = vmul.f32 %v744, 0.7978846
    %v809 = vmul.f32 %v745, 0.7978846
    %v810 = vmul.f32 %v746, 0.7978846
    %v811 = vmul.f32 %v747, 0.7978846
    %v812 = vmul.f32 %v748, 0.7978846
    %v813 = vmul.f32 %v749, 0.7978846
    %v814 = vmul.f32 %v750, 0.7978846
    %v815 = vmul.f32 %v751, 0.7978846
    %v816 = vmul.f32 %v752, 0.7978846
    %v817 = vmul.f32 %v753, 0.7978846
    %v818 = vmul.f32 %v754, 0.7978846
    %v819 = vmul.f32 %v755, 0.7978846
    %v820 = vmul.f32 %v756, 0.7978846
    %v821 = vmul.f32 %v757, 0.7978846
    %v822 = vmul.f32 %v758, 0.7978846
    %v823 = vmul.f32 %v759, 0.7978846
    %v824 = vmul.f32 %v760, 0.7978846
    %v825 = vmul.f32 %v761, 0.7978846
    %v826 = vmul.f32 %v762, 0.7978846
    %v827 = vmul.f32 %v763, 0.7978846
    %v828 = vmul.f32 %v764, 0.7978846
    %v829 = vmul.f32 %v765, 0.7978846
    %v830 = vmul.f32 %v766, 0.7978846
    %v831 = vmul.f32 %v767, 0.7978846
    %v832 = vmul.f32 %v768, 0.7978846
    %v833 = vmul.f32 %v769, 0.7978846
    %v834 = vmul.f32 %v770, 0.7978846
    %v835 = vmul.f32 %v771, 0.7978846
    %v836 = vmul.f32 %v772, 0.7978846
    %v837 = vmul.f32 %v773, 0.7978846
    %v838 = vmul.f32 %v774, 0.7978846
    %v839 = vmul.f32 %v775, 0.7978846
    %v840 = vmul.f32 %v776, 0.7978846
    %v841 = vmul.f32 %v777, 0.7978846
    %v842 = vmul.f32 %v778, 0.7978846
    %v843 = vmul.f32 %v779, 0.7978846
    %v844 = vtanh.pop %v780
    %v845 = vtanh.pop %v781
    %v846 = vtanh.pop %v782
    %v847 = vtanh.pop %v783
    %v848 = vtanh.pop %v784
    %v849 = vtanh.pop %v785
    %v850 = vtanh.pop %v786
    %v851 = vtanh.pop %v787
    %v852 = vtanh.pop %v788
    %v853 = vtanh.pop %v789
    %v854 = vtanh.pop %v790
    %v855 = vtanh.pop %v791
    %v856 = vtanh.pop %v792
    %v857 = vtanh.pop %v793
    %v858 = vtanh.pop %v794
    %v859 = vtanh.pop %v795
    %v860 = vtanh.pop %v796
    %v861 = vtanh.pop %v797
    %v862 = vtanh.pop %v798
    %v863 = vtanh.pop %v799
    %v864 = vtanh.pop %v800
    %v865 = vtanh.pop %v801
    %v866 = vtanh.pop %v802
    %v867 = vtanh.pop %v803
    %v868 = vtanh.pop %v804
    %v869 = vtanh.pop %v805
    %v870 = vtanh.pop %v806
    %v871 = vtanh.pop %v807
    %v872 = vtanh.pop %v808
    %v873 = vtanh.pop %v809
    %v874 = vtanh.pop %v810
    %v875 = vtanh.pop %v811
    %v876 = vtanh.pop %v812
    %v877 = vtanh.pop %v813
    %v878 = vtanh.pop %v814
    %v879 = vtanh.pop %v815
    %v880 = vtanh.pop %v816
    %v881 = vtanh.pop %v817
    %v882 = vtanh.pop %v818
    %v883 = vtanh.pop %v819
    %v884 = vtanh.pop %v820
    %v885 = vtanh.pop %v821
    %v886 = vtanh.pop %v822
    %v887 = vtanh.pop %v823
    %v888 = vtanh.pop %v824
    %v889 = vtanh.pop %v825
    %v890 = vtanh.pop %v826
    %v891 = vtanh.pop %v827
    %v892 = vtanh.pop %v828
    %v893 = vtanh.pop %v829
    %v894 = vtanh.pop %v830
    %v895 = vtanh.pop %v831
    %v896 = vtanh.pop %v832
    %v897 = vtanh.pop %v833
    %v898 = vtanh.pop %v834
    %v899 = vtanh.pop %v835
    %v900 = vtanh.pop %v836
    %v901 = vtanh.pop %v837
    %v902 = vtanh.pop %v838
    %v903 = vtanh.pop %v839
    %v904 = vtanh.pop %v840
    %v905 = vtanh.pop %v841
    %v906 = vtanh.pop %v842
    %v907 = vtanh.pop %v843
    %v908 = vadd.f32 %v844, 1.0
    %v909 = vadd.f32 %v845, 1.0
    %v910 = vadd.f32 %v846, 1.0
    %v911 = vadd.f32 %v847, 1.0
    %v912 = vadd.f32 %v848, 1.0
    %v913 = vadd.f32 %v849, 1.0
    %v914 = vadd.f32 %v850, 1.0
    %v915 = vadd.f32 %v851, 1.0
    %v916 = vadd.f32 %v852, 1.0
    %v917 = vadd.f32 %v853, 1.0
    %v918 = vadd.f32 %v854, 1.0
    %v919 = vadd.f32 %v855, 1.0
    %v920 = vadd.f32 %v856, 1.0
    %v921 = vadd.f32 %v857, 1.0
    %v922 = vadd.f32 %v858, 1.0
    %v923 = vadd.f32 %v859, 1.0
    %v924 = vadd.f32 %v860, 1.0
    %v925 = vadd.f32 %v861, 1.0
    %v926 = vadd.f32 %v862, 1.0
    %v927 = vadd.f32 %v863, 1.0
    %v928 = vadd.f32 %v864, 1.0
    %v929 = vadd.f32 %v865, 1.0
    %v930 = vadd.f32 %v866, 1.0
    %v931 = vadd.f32 %v867, 1.0
    %v932 = vadd.f32 %v868, 1.0
    %v933 = vadd.f32 %v869, 1.0
    %v934 = vadd.f32 %v870, 1.0
    %v935 = vadd.f32 %v871, 1.0
    %v936 = vadd.f32 %v872, 1.0
    %v937 = vadd.f32 %v873, 1.0
    %v938 = vadd.f32 %v874, 1.0
    %v939 = vadd.f32 %v875, 1.0
    %v940 = vadd.f32 %v876, 1.0
    %v941 = vadd.f32 %v877, 1.0
    %v942 = vadd.f32 %v878, 1.0
    %v943 = vadd.f32 %v879, 1.0
    %v944 = vadd.f32 %v880, 1.0
    %v945 = vadd.f32 %v881, 1.0
    %v946 = vadd.f32 %v882, 1.0
    %v947 = vadd.f32 %v883, 1.0
    %v948 = vadd.f32 %v884, 1.0
    %v949 = vadd.f32 %v885, 1.0
    %v950 = vadd.f32 %v886, 1.0
    %v951 = vadd.f32 %v887, 1.0
    %v952 = vadd.f32 %v888, 1.0
    %v953 = vadd.f32 %v889, 1.0
    %v954 = vadd.f32 %v890, 1.0
    %v955 = vadd.f32 %v891, 1.0
    %v956 = vadd.f32 %v892, 1.0
    %v957 = vadd.f32 %v893, 1.0
    %v958 = vadd.f32 %v894, 1.0
    %v959 = vadd.f32 %v895, 1.0
    %v960 = vadd.f32 %v896, 1.0
    %v961 = vadd.f32 %v897, 1.0
    %v962 = vadd.f32 %v898, 1.0
    %v963 = vadd.f32 %v899, 1.0
    %v964 = vadd.f32 %v900, 1.0
    %v965 = vadd.f32 %v901, 1.0
    %v966 = vadd.f32 %v902, 1.0
    %v967 = vadd.f32 %v903, 1.0
    %v968 = vadd.f32 %v904, 1.0
    %v969 = vadd.f32 %v905, 1.0
    %v970 = vadd.f32 %v906, 1.0
    %v971 = vadd.f32 %v907, 1.0
    %v972 = vmul.f32 %v338, 0.5
    %v973 = vmul.f32 %v387, 0.5
    %v974 = vmul.f32 %v436, 0.5
    %v975 = vmul.f32 %v485, 0.5
    %v976 = vmul.f32 %v340, 0.5
    %v977 = vmul.f32 %v389, 0.5
    %v978 = vmul.f32 %v438, 0.5
    %v979 = vmul.f32 %v487, 0.5
    %v980 = vmul.f32 %v343, 0.5
    %v981 = vmul.f32 %v392, 0.5
    %v982 = vmul.f32 %v441, 0.5
    %v983 = vmul.f32 %v490, 0.5
    %v984 = vmul.f32 %v345, 0.5
    %v985 = vmul.f32 %v394, 0.5
    %v986 = vmul.f32 %v443, 0.5
    %v987 = vmul.f32 %v492, 0.5
    %v988 = vmul.f32 %v348, 0.5
    %v989 = vmul.f32 %v397, 0.5
    %v990 = vmul.f32 %v446, 0.5
    %v991 = vmul.f32 %v495, 0.5
    %v992 = vmul.f32 %v350, 0.5
    %v993 = vmul.f32 %v399, 0.5
    %v994 = vmul.f32 %v448, 0.5
    %v995 = vmul.f32 %v497, 0.5
    %v996 = vmul.f32 %v353, 0.5
    %v997 = vmul.f32 %v402, 0.5
    %v998 = vmul.f32 %v451, 0.5
    %v999 = vmul.f32 %v500, 0.5
    %v1000 = vmul.f32 %v355, 0.5
    %v1001 = vmul.f32 %v404, 0.5
    %v1002 = vmul.f32 %v453, 0.5
    %v1003 = vmul.f32 %v502, 0.5
    %v1004 = vmul.f32 %v358, 0.5
    %v1005 = vmul.f32 %v407, 0.5
    %v1006 = vmul.f32 %v456, 0.5
    %v1007 = vmul.f32 %v505, 0.5
    %v1008 = vmul.f32 %v360, 0.5
    %v1009 = vmul.f32 %v409, 0.5
    %v1010 = vmul.f32 %v458, 0.5
    %v1011 = vmul.f32 %v507, 0.5
    %v1012 = vmul.f32 %v363, 0.5
    %v1013 = vmul.f32 %v412, 0.5
    %v1014 = vmul.f32 %v461, 0.5
    %v1015 = vmul.f32 %v510, 0.5
    %v1016 = vmul.f32 %v365, 0.5
    %v1017 = vmul.f32 %v414, 0.5
    %v1018 = vmul.f32 %v463, 0.5
    %v1019 = vmul.f32 %v512, 0.5
    %v1020 = vmul.f32 %v368, 0.5
    %v1021 = vmul.f32 %v417, 0.5
    %v1022 = vmul.f32 %v466, 0.5
    %v1023 = vmul.f32 %v515, 0.5
    %v1024 = vmul.f32 %v370, 0.5
    %v1025 = vmul.f32 %v419, 0.5
    %v1026 = vmul.f32 %v468, 0.5
    %v1027 = vmul.f32 %v517, 0.5
    %v1028 = vmul.f32 %v373, 0.5
    %v1029 = vmul.f32 %v422, 0.5
    %v1030 = vmul.f32 %v471, 0.5
    %v1031 = vmul.f32 %v520, 0.5
    %v1032 = vmul.f32 %v375, 0.5
    %v1033 = vmul.f32 %v424, 0.5
    %v1034 = vmul.f32 %v473, 0.5
    %v1035 = vmul.f32 %v522, 0.5
    %v1036 = vmul.f32 %v972, %v908
    %v1037 = vmul.f32 %v973, %v909
    %v1038 = vmul.f32 %v974, %v910
    %v1039 = vmul.f32 %v975, %v911
    %v1040 = vmul.f32 %v976, %v912
    %v1041 = vmul.f32 %v977, %v913
    %v1042 = vmul.f32 %v978, %v914
    %v1043 = vmul.f32 %v979, %v915
    %v1044 = vmul.f32 %v980, %v916
    %v1045 = vmul.f32 %v981, %v917
    %v1046 = vmul.f32 %v982, %v918
    %v1047 = vmul.f32 %v983, %v919
    %v1048 = vmul.f32 %v984, %v920
    %v1049 = vmul.f32 %v985, %v921
    %v1050 = vmul.f32 %v986, %v922
    %v1051 = vmul.f32 %v987, %v923
    %v1052 = vmul.f32 %v988, %v924
    %v1053 = vmul.f32 %v989, %v925
    %v1054 = vmul.f32 %v990, %v926
    %v1055 = vmul.f32 %v991, %v927
    %v1056 = vmul.f32 %v992, %v928
    %v1057 = vmul.f32 %v993, %v929
    %v1058 = vmul.f32 %v994, %v930
    %v1059 = vmul.f32 %v995, %v931
    %v1060 = vmul.f32 %v996, %v932
    %v1061 = vmul.f32 %v997, %v933
    %v1062 = vmul.f32 %v998, %v934
    %v1063 = vmul.f32 %v999, %v935
    %v1064 = vmul.f32 %v1000, %v936
    %v1065 = vmul.f32 %v1001, %v937
    %v1066 = vmul.f32 %v1002, %v938
    %v1067 = vmul.f32 %v1003, %v939
    %v1068 = vmul.f32 %v1004, %v940
    %v1069 = vmul.f32 %v1005, %v941
    %v1070 = vmul.f32 %v1006, %v942
    %v1071 = vmul.f32 %v1007, %v943
    %v1072 = vmul.f32 %v1008, %v944
    %v1073 = vmul.f32 %v1009, %v945
    %v1074 = vmul.f32 %v1010, %v946
    %v1075 = vmul.f32 %v1011, %v947
    %v1076 = vmul.f32 %v1012, %v948
    %v1077 = vmul.f32 %v1013, %v949
    %v1078 = vmul.f32 %v1014, %v950
    %v1079 = vmul.f32 %v1015, %v951
    %v1080 = vmul.f32 %v1016, %v952
    %v1081 = vmul.f32 %v1017, %v953
    %v1082 = vmul.f32 %v1018, %v954
    %v1083 = vmul.f32 %v1019, %v955
    %v1084 = vmul.f32 %v1020, %v956
    %v1085 = vmul.f32 %v1021, %v957
    %v1086 = vmul.f32 %v1022, %v958
    %v1087 = vmul.f32 %v1023, %v959
    %v1088 = vmul.f32 %v1024, %v960
    %v1089 = vmul.f32 %v1025, %v961
    %v1090 = vmul.f32 %v1026, %v962
    %v1091 = vmul.f32 %v1027, %v963
    %v1092 = vmul.f32 %v1028, %v964
    %v1093 = vmul.f32 %v1029, %v965
    %v1094 = vmul.f32 %v1030, %v966
    %v1095 = vmul.f32 %v1031, %v967
    %v1096 = vmul.f32 %v1032, %v968
    %v1097 = vmul.f32 %v1033, %v969
    %v1098 = vmul.f32 %v1034, %v970
    %v1099 = vmul.f32 %v1035, %v971
    %v1100 = vld [vmem:[#allocation2] sm:$0xff]
    %v1101 = vld [vmem:[#allocation2 + $0x8] sm:$0xff]
    %v1102 = vld [vmem:[#allocation2 + $0x10] sm:$0xff]
    %v1103 = vld [vmem:[#allocation2 + $0x18] sm:$0xff]
    %v1104 = vld [vmem:[#allocation2 + $0x20] sm:$0xff]
    %v1105 = vld [vmem:[#allocation2 + $0x28] sm:$0xff]
    %v1106 = vld [vmem:[#allocation2 + $0x30] sm:$0xff]
    %v1107 = vld [vmem:[#allocation2 + $0x38] sm:$0xff]
    %v1108 = vld [vmem:[#allocation2 + $0x40] sm:$0xff]
    %v1109 = vld [vmem:[#allocation2 + $0x48] sm:$0xff]
    %v1110 = vld [vmem:[#allocation2 + $0x50] sm:$0xff]
    %v1111 = vld [vmem:[#allocation2 + $0x58] sm:$0xff]
    %v1112 = vld [vmem:[#allocation2 + $0x60] sm:$0xff]
    %v1113 = vld [vmem:[#allocation2 + $0x68] sm:$0xff]
    %v1114 = vld [vmem:[#allocation2 + $0x70] sm:$0xff]
    %v1115 = vld [vmem:[#allocation2 + $0x78] sm:$0xff]
    %v1116 = vpack.c.bf16 %v1040, %v1036
    %v1117 = vpack.c.bf16 %v1041, %v1037
    %v1118 = vpack.c.bf16 %v1042, %v1038
    %v1119 = vpack.c.bf16 %v1043, %v1039
    %v1120 = vpack.c.bf16 %v1048, %v1044
    %v1121 = vpack.c.bf16 %v1049, %v1045
    %v1122 = vpack.c.bf16 %v1050, %v1046
    %v1123 = vpack.c.bf16 %v1051, %v1047
    %v1124 = vpack.c.bf16 %v1056, %v1052
    %v1125 = vpack.c.bf16 %v1057, %v1053
    %v1126 = vpack.c.bf16 %v1058, %v1054
    %v1127 = vpack.c.bf16 %v1059, %v1055
    %v1128 = vpack.c.bf16 %v1064, %v1060
    %v1129 = vpack.c.bf16 %v1065, %v1061
    %v1130 = vpack.c.bf16 %v1066, %v1062
    %v1131 = vpack.c.bf16 %v1067, %v1063
    %v1132 = vpack.c.bf16 %v1072, %v1068
    %v1133 = vpack.c.bf16 %v1073, %v1069
    %v1134 = vpack.c.bf16 %v1074, %v1070
    %v1135 = vpack.c.bf16 %v1075, %v1071
    %v1136 = vpack.c.bf16 %v1080, %v1076
    %v1137 = vpack.c.bf16 %v1081, %v1077
    %v1138 = vpack.c.bf16 %v1082, %v1078
    %v1139 = vpack.c.bf16 %v1083, %v1079
    %v1140 = vpack.c.bf16 %v1088, %v1084
    %v1141 = vpack.c.bf16 %v1089, %v1085
    %v1142 = vpack.c.bf16 %v1090, %v1086
    %v1143 = vpack.c.bf16 %v1091, %v1087
    %v1144 = vpack.c.bf16 %v1096, %v1092
    %v1145 = vpack.c.bf16 %v1097, %v1093
    %v1146 = vpack.c.bf16 %v1098, %v1094
    %v1147 = vpack.c.bf16 %v1099, %v1095
    %v1148 = vld [vmem:[#allocation9] sm:$0xf]
    %v1149 = vld [vmem:[#allocation9 + $0x4] sm:$0xf]
    %v1150 = vld [vmem:[#allocation9 + $0x8] sm:$0xf]
    %v1151 = vld [vmem:[#allocation9 + $0xc] sm:$0xf]
    %v1152 = vld [vmem:[#allocation9 + $0x10] sm:$0xf]
    %v1153 = vld [vmem:[#allocation9 + $0x14] sm:$0xf]
    %v1154 = vld [vmem:[#allocation9 + $0x18] sm:$0xf]
    %v1155 = vld [vmem:[#allocation9 + $0x1c] sm:$0xf]
    %v1156 = vld [vmem:[#allocation9 + $0x20] sm:$0xf]
    %v1157 = vld [vmem:[#allocation9 + $0x24] sm:$0xf]
    %v1158 = vld [vmem:[#allocation9 + $0x28] sm:$0xf]
    %v1159 = vld [vmem:[#allocation9 + $0x2c] sm:$0xf]
    %v1160 = vld [vmem:[#allocation9 + $0x30] sm:$0xf]
    %v1161 = vld [vmem:[#allocation9 + $0x34] sm:$0xf]
    %v1162 = vld [vmem:[#allocation9 + $0x38] sm:$0xf]
    %v1163 = vld [vmem:[#allocation9 + $0x3c] sm:$0xf]
    %v1164 = vld [vmem:[#allocation9 + $0x40] sm:$0xf]
    %v1165 = vld [vmem:[#allocation9 + $0x44] sm:$0xf]
    %v1166 = vld [vmem:[#allocation9 + $0x48] sm:$0xf]
    %v1167 = vld [vmem:[#allocation9 + $0x4c] sm:$0xf]
    %v1168 = vld [vmem:[#allocation9 + $0x50] sm:$0xf]
    %v1169 = vld [vmem:[#allocation9 + $0x54] sm:$0xf]
    %v1170 = vld [vmem:[#allocation9 + $0x58] sm:$0xf]
    %v1171 = vld [vmem:[#allocation9 + $0x5c] sm:$0xf]
    %v1172 = vld [vmem:[#allocation9 + $0x60] sm:$0xf]
    %v1173 = vld [vmem:[#allocation9 + $0x64] sm:$0xf]
    %v1174 = vld [vmem:[#allocation9 + $0x68] sm:$0xf]
    %v1175 = vld [vmem:[#allocation9 + $0x6c] sm:$0xf]
    %v1176 = vld [vmem:[#allocation9 + $0x70] sm:$0xf]
    %v1177 = vld [vmem:[#allocation9 + $0x74] sm:$0xf]
    %v1178 = vld [vmem:[#allocation9 + $0x78] sm:$0xf]
    %v1179 = vld [vmem:[#allocation9 + $0x7c] sm:$0xf]
    %v1180 = vld [vmem:[#allocation9 + $0x80] sm:$0xf]
    %v1181 = vld [vmem:[#allocation9 + $0x84] sm:$0xf]
    %v1182 = vld [vmem:[#allocation9 + $0x88] sm:$0xf]
    %v1183 = vld [vmem:[#allocation9 + $0x8c] sm:$0xf]
    %v1184 = vld [vmem:[#allocation9 + $0x90] sm:$0xf]
    %v1185 = vld [vmem:[#allocation9 + $0x94] sm:$0xf]
    %v1186 = vld [vmem:[#allocation9 + $0x98] sm:$0xf]
    %v1187 = vld [vmem:[#allocation9 + $0x9c] sm:$0xf]
    %v1188 = vld [vmem:[#allocation9 + $0xa0] sm:$0xf]
    %v1189 = vld [vmem:[#allocation9 + $0xa4] sm:$0xf]
    %v1190 = vld [vmem:[#allocation9 + $0xa8] sm:$0xf]
    %v1191 = vld [vmem:[#allocation9 + $0xac] sm:$0xf]
    %v1192 = vld [vmem:[#allocation9 + $0xb0] sm:$0xf]
    %v1193 = vld [vmem:[#allocation9 + $0xb4] sm:$0xf]
    %v1194 = vld [vmem:[#allocation9 + $0xb8] sm:$0xf]
    %v1195 = vld [vmem:[#allocation9 + $0xbc] sm:$0xf]
    %v1196 = vld [vmem:[#allocation9 + $0xc0] sm:$0xf]
    %v1197 = vld [vmem:[#allocation9 + $0xc4] sm:$0xf]
    %v1198 = vld [vmem:[#allocation9 + $0xc8] sm:$0xf]
    %v1199 = vld [vmem:[#allocation9 + $0xcc] sm:$0xf]
    %v1200 = vld [vmem:[#allocation9 + $0xd0] sm:$0xf]
    %v1201 = vld [vmem:[#allocation9 + $0xd4] sm:$0xf]
    %v1202 = vld [vmem:[#allocation9 + $0xd8] sm:$0xf]
    %v1203 = vld [vmem:[#allocation9 + $0xdc] sm:$0xf]
    %v1204 = vld [vmem:[#allocation9 + $0xe0] sm:$0xf]
    %v1205 = vld [vmem:[#allocation9 + $0xe4] sm:$0xf]
    %v1206 = vld [vmem:[#allocation9 + $0xe8] sm:$0xf]
    %v1207 = vld [vmem:[#allocation9 + $0xec] sm:$0xf]
    %v1208 = vld [vmem:[#allocation9 + $0xf0] sm:$0xf]
    %v1209 = vld [vmem:[#allocation9 + $0xf4] sm:$0xf]
    %v1210 = vld [vmem:[#allocation9 + $0xf8] sm:$0xf]
    %v1211 = vld [vmem:[#allocation9 + $0xfc] sm:$0xf]
    %v1276 = vunpack.c.l.b16 %v1148
    %v1277 = vunpack.c.l.b16 %v1149
    %v1278 = vunpack.c.l.b16 %v1150
    %v1279 = vunpack.c.l.b16 %v1151
    %v1280 = vunpack.c.l.b16 %v1152
    %v1281 = vunpack.c.l.b16 %v1153
    %v1282 = vunpack.c.l.b16 %v1154
    %v1283 = vunpack.c.l.b16 %v1155
    %v1284 = vunpack.c.l.b16 %v1156
    %v1285 = vunpack.c.l.b16 %v1157
    %v1286 = vunpack.c.l.b16 %v1158
    %v1287 = vunpack.c.l.b16 %v1159
    %v1288 = vunpack.c.l.b16 %v1160
    %v1289 = vunpack.c.l.b16 %v1161
    %v1290 = vunpack.c.l.b16 %v1162
    %v1291 = vunpack.c.l.b16 %v1163
    %v1292 = vunpack.c.l.b16 %v1164
    %v1293 = vunpack.c.l.b16 %v1165
    %v1294 = vunpack.c.l.b16 %v1166
    %v1295 = vunpack.c.l.b16 %v1167
    %v1296 = vunpack.c.l.b16 %v1168
    %v1297 = vunpack.c.l.b16 %v1169
    %v1298 = vunpack.c.l.b16 %v1170
    %v1299 = vunpack.c.l.b16 %v1171
    %v1300 = vunpack.c.l.b16 %v1172
    %v1301 = vunpack.c.l.b16 %v1173
    %v1302 = vunpack.c.l.b16 %v1174
    %v1303 = vunpack.c.l.b16 %v1175
    %v1304 = vunpack.c.l.b16 %v1176
    %v1305 = vunpack.c.l.b16 %v1177
    %v1306 = vunpack.c.l.b16 %v1178
    %v1307 = vunpack.c.l.b16 %v1179
    %v1308 = vunpack.c.l.b16 %v1180
    %v1309 = vunpack.c.l.b16 %v1181
    %v1310 = vunpack.c.l.b16 %v1182
    %v1311 = vunpack.c.l.b16 %v1183
    %v1312 = vunpack.c.l.b16 %v1184
    %v1313 = vunpack.c.l.b16 %v1185
    %v1314 = vunpack.c.l.b16 %v1186
    %v1315 = vunpack.c.l.b16 %v1187
    %v1316 = vunpack.c.l.b16 %v1188
    %v1317 = vunpack.c.l.b16 %v1189
    %v1318 = vunpack.c.l.b16 %v1190
    %v1319 = vunpack.c.l.b16 %v1191
    %v1320 = vunpack.c.l.b16 %v1192
    %v1321 = vunpack.c.l.b16 %v1193
    %v1322 = vunpack.c.l.b16 %v1194
    %v1323 = vunpack.c.l.b16 %v1195
    %v1324 = vunpack.c.l.b16 %v1196
    %v1325 = vunpack.c.l.b16 %v1197
    %v1326 = vunpack.c.l.b16 %v1198
    %v1327 = vunpack.c.l.b16 %v1199
    %v1328 = vunpack.c.l.b16 %v1200
    %v1329 = vunpack.c.l.b16 %v1201
    %v1330 = vunpack.c.l.b16 %v1202
    %v1331 = vunpack.c.l.b16 %v1203
    %v1332 = vunpack.c.l.b16 %v1204
    %v1333 = vunpack.c.l.b16 %v1205
    %v1334 = vunpack.c.l.b16 %v1206
    %v1335 = vunpack.c.l.b16 %v1207
    %v1336 = vunpack.c.l.b16 %v1208
    %v1337 = vunpack.c.l.b16 %v1209
    %v1338 = vunpack.c.l.b16 %v1210
    %v1339 = vunpack.c.l.b16 %v1211
    %v1340 = vpack.c.b16 %v1277, %v1276
    %v1341 = vpack.c.b16 %v1279, %v1278
    %v1342 = vpack.c.b16 %v1281, %v1280
    %v1343 = vpack.c.b16 %v1283, %v1282
    %v1344 = vpack.c.b16 %v1285, %v1284
    %v1345 = vpack.c.b16 %v1287, %v1286
    %v1346 = vpack.c.b16 %v1289, %v1288
    %v1347 = vpack.c.b16 %v1291, %v1290
    %v1348 = vpack.c.b16 %v1293, %v1292
    %v1349 = vpack.c.b16 %v1295, %v1294
    %v1350 = vpack.c.b16 %v1297, %v1296
    %v1351 = vpack.c.b16 %v1299, %v1298
    %v1352 = vpack.c.b16 %v1301, %v1300
    %v1353 = vpack.c.b16 %v1303, %v1302
    %v1354 = vpack.c.b16 %v1305, %v1304
    %v1355 = vpack.c.b16 %v1307, %v1306
    %v1356 = vpack.c.b16 %v1309, %v1308
    %v1357 = vpack.c.b16 %v1311, %v1310
    %v1358 = vpack.c.b16 %v1313, %v1312
    %v1359 = vpack.c.b16 %v1315, %v1314
    %v1360 = vpack.c.b16 %v1317, %v1316
    %v1361 = vpack.c.b16 %v1319, %v1318
    %v1362 = vpack.c.b16 %v1321, %v1320
    %v1363 = vpack.c.b16 %v1323, %v1322
    %v1364 = vpack.c.b16 %v1325, %v1324
    %v1365 = vpack.c.b16 %v1327, %v1326
    %v1366 = vpack.c.b16 %v1329, %v1328
    %v1367 = vpack.c.b16 %v1331, %v1330
    %v1368 = vpack.c.b16 %v1333, %v1332
    %v1369 = vpack.c.b16 %v1335, %v1334
    %v1370 = vpack.c.b16 %v1337, %v1336
    %v1371 = vpack.c.b16 %v1339, %v1338
    %1404 = vmatpush.bf16.msra.mxu0 %v1347
    %1405 = vmatpush.bf16.msra.mxu0 %v1346
    %1406 = vmatpush.bf16.msra.mxu0 %v1345
    %1407 = vmatpush.bf16.msra.mxu0 %v1344
    %1408 = vmatpush.bf16.msra.mxu0 %v1343
    %1409 = vmatpush.bf16.msra.mxu0 %v1342
    %1410 = vmatpush.bf16.msra.mxu0 %v1341
    %1411 = vmatpush.bf16.msra.mxu0 %v1340
    %1412 = vmatmul.bf16.gmra.mxu0 %v1116
    %v1413 = vpop.f32.mrf.mxu0
    %v1414 = vadd.f32 0.0, %v1413
    %v1415 = vpop.f32.mrf.mxu0
    %v1416 = vadd.f32 0.0, %v1415
    %1417 = vmatmul.bf16.gmra.mxu0 %v1120
    %v1418 = vpop.f32.mrf.mxu0
    %v1419 = vadd.f32 0.0, %v1418
    %v1420 = vpop.f32.mrf.mxu0
    %v1421 = vadd.f32 0.0, %v1420
    %1422 = vmatmul.bf16.gmra.mxu0 %v1124
    %v1423 = vpop.f32.mrf.mxu0
    %v1424 = vadd.f32 0.0, %v1423
    %v1425 = vpop.f32.mrf.mxu0
    %v1426 = vadd.f32 0.0, %v1425
    %1427 = vmatmul.bf16.gmra.mxu0 %v1128
    %v1428 = vpop.f32.mrf.mxu0
    %v1429 = vadd.f32 0.0, %v1428
    %v1430 = vpop.f32.mrf.mxu0
    %v1431 = vadd.f32 0.0, %v1430
    %1432 = vmatmul.bf16.gmra.mxu0 %v1132
    %v1433 = vpop.f32.mrf.mxu0
    %v1434 = vadd.f32 0.0, %v1433
    %v1435 = vpop.f32.mrf.mxu0
    %v1436 = vadd.f32 0.0, %v1435
    %1437 = vmatmul.bf16.gmra.mxu0 %v1136
    %v1438 = vpop.f32.mrf.mxu0
    %v1439 = vadd.f32 0.0, %v1438
    %v1440 = vpop.f32.mrf.mxu0
    %v1441 = vadd.f32 0.0, %v1440
    %1442 = vmatmul.bf16.gmra.mxu0 %v1140
    %v1443 = vpop.f32.mrf.mxu0
    %v1444 = vadd.f32 0.0, %v1443
    %v1445 = vpop.f32.mrf.mxu0
    %v1446 = vadd.f32 0.0, %v1445
    %1447 = vmatmul.bf16.gmra.mxu0 %v1144
    %v1448 = vpop.f32.mrf.mxu0
    %v1449 = vadd.f32 0.0, %v1448
    %v1450 = vpop.f32.mrf.mxu0
    %v1451 = vadd.f32 0.0, %v1450
    %1452 = vdwg.mxu0
    %1453 = vmatpush.bf16.msra.mxu0 %v1355
    %1454 = vmatpush.bf16.msra.mxu0 %v1354
    %1455 = vmatpush.bf16.msra.mxu0 %v1353
    %1456 = vmatpush.bf16.msra.mxu0 %v1352
    %1457 = vmatpush.bf16.msra.mxu0 %v1351
    %1458 = vmatpush.bf16.msra.mxu0 %v1350
    %1459 = vmatpush.bf16.msra.mxu0 %v1349
    %1460 = vmatpush.bf16.msra.mxu0 %v1348
    %1461 = vmatmul.bf16.gmra.mxu0 %v1117
    %v1462 = vpop.f32.mrf.mxu0
    %v1463 = vadd.f32 %v1414, %v1462
    %v1464 = vpop.f32.mrf.mxu0
    %v1465 = vadd.f32 %v1416, %v1464
    %1466 = vmatmul.bf16.gmra.mxu0 %v1121
    %v1467 = vpop.f32.mrf.mxu0
    %v1468 = vadd.f32 %v1419, %v1467
    %v1469 = vpop.f32.mrf.mxu0
    %v1470 = vadd.f32 %v1421, %v1469
    %1471 = vmatmul.bf16.gmra.mxu0 %v1125
    %v1472 = vpop.f32.mrf.mxu0
    %v1473 = vadd.f32 %v1424, %v1472
    %v1474 = vpop.f32.mrf.mxu0
    %v1475 = vadd.f32 %v1426, %v1474
    %1476 = vmatmul.bf16.gmra.mxu0 %v1129
    %v1477 = vpop.f32.mrf.mxu0
    %v1478 = vadd.f32 %v1429, %v1477
    %v1479 = vpop.f32.mrf.mxu0
    %v1480 = vadd.f32 %v1431, %v1479
    %1481 = vmatmul.bf16.gmra.mxu0 %v1133
    %v1482 = vpop.f32.mrf.mxu0
    %v1483 = vadd.f32 %v1434, %v1482
    %v1484 = vpop.f32.mrf.mxu0
    %v1485 = vadd.f32 %v1436, %v1484
    %1486 = vmatmul.bf16.gmra.mxu0 %v1137
    %v1487 = vpop.f32.mrf.mxu0
    %v1488 = vadd.f32 %v1439, %v1487
    %v1489 = vpop.f32.mrf.mxu0
    %v1490 = vadd.f32 %v1441, %v1489
    %1491 = vmatmul.bf16.gmra.mxu0 %v1141
    %v1492 = vpop.f32.mrf.mxu0
    %v1493 = vadd.f32 %v1444, %v1492
    %v1494 = vpop.f32.mrf.mxu0
    %v1495 = vadd.f32 %v1446, %v1494
    %1496 = vmatmul.bf16.gmra.mxu0 %v1145
    %v1497 = vpop.f32.mrf.mxu0
    %v1498 = vadd.f32 %v1449, %v1497
    %v1499 = vpop.f32.mrf.mxu0
    %v1500 = vadd.f32 %v1451, %v1499
    %1501 = vdwg.mxu0
    %1502 = vmatpush.bf16.msra.mxu0 %v1363
    %1503 = vmatpush.bf16.msra.mxu0 %v1362
    %1504 = vmatpush.bf16.msra.mxu0 %v1361
    %1505 = vmatpush.bf16.msra.mxu0 %v1360
    %1506 = vmatpush.bf16.msra.mxu0 %v1359
    %1507 = vmatpush.bf16.msra.mxu0 %v1358
    %1508 = vmatpush.bf16.msra.mxu0 %v1357
    %1509 = vmatpush.bf16.msra.mxu0 %v1356
    %1510 = vmatmul.bf16.gmra.mxu0 %v1118
    %v1511 = vpop.f32.mrf.mxu0
    %v1512 = vadd.f32 %v1463, %v1511
    %v1513 = vpop.f32.mrf.mxu0
    %v1514 = vadd.f32 %v1465, %v1513
    %1515 = vmatmul.bf16.gmra.mxu0 %v1122
    %v1516 = vpop.f32.mrf.mxu0
    %v1517 = vadd.f32 %v1468, %v1516
    %v1518 = vpop.f32.mrf.mxu0
    %v1519 = vadd.f32 %v1470, %v1518
    %1520 = vmatmul.bf16.gmra.mxu0 %v1126
    %v1521 = vpop.f32.mrf.mxu0
    %v1522 = vadd.f32 %v1473, %v1521
    %v1523 = vpop.f32.mrf.mxu0
    %v1524 = vadd.f32 %v1475, %v1523
    %1525 = vmatmul.bf16.gmra.mxu0 %v1130
    %v1526 = vpop.f32.mrf.mxu0
    %v1527 = vadd.f32 %v1478, %v1526
    %v1528 = vpop.f32.mrf.mxu0
    %v1529 = vadd.f32 %v1480, %v1528
    %1530 = vmatmul.bf16.gmra.mxu0 %v1134
    %v1531 = vpop.f32.mrf.mxu0
    %v1532 = vadd.f32 %v1483, %v1531
    %v1533 = vpop.f32.mrf.mxu0
    %v1534 = vadd.f32 %v1485, %v1533
    %1535 = vmatmul.bf16.gmra.mxu0 %v1138
    %v1536 = vpop.f32.mrf.mxu0
    %v1537 = vadd.f32 %v1488, %v1536
    %v1538 = vpop.f32.mrf.mxu0
    %v1539 = vadd.f32 %v1490, %v1538
    %1540 = vmatmul.bf16.gmra.mxu0 %v1142
    %v1541 = vpop.f32.mrf.mxu0
    %v1542 = vadd.f32 %v1493, %v1541
    %v1543 = vpop.f32.mrf.mxu0
    %v1544 = vadd.f32 %v1495, %v1543
    %1545 = vmatmul.bf16.gmra.mxu0 %v1146
    %v1546 = vpop.f32.mrf.mxu0
    %v1547 = vadd.f32 %v1498, %v1546
    %v1548 = vpop.f32.mrf.mxu0
    %v1549 = vadd.f32 %v1500, %v1548
    %1550 = vdwg.mxu0
    %1551 = vmatpush.bf16.msra.mxu0 %v1371
    %1552 = vmatpush.bf16.msra.mxu0 %v1370
    %1553 = vmatpush.bf16.msra.mxu0 %v1369
    %1554 = vmatpush.bf16.msra.mxu0 %v1368
    %1555 = vmatpush.bf16.msra.mxu0 %v1367
    %1556 = vmatpush.bf16.msra.mxu0 %v1366
    %1557 = vmatpush.bf16.msra.mxu0 %v1365
    %1558 = vmatpush.bf16.msra.mxu0 %v1364
    %1559 = vmatmul.bf16.gmra.mxu0 %v1119
    %v1560 = vpop.f32.mrf.mxu0
    %v1561 = vadd.f32 %v1512, %v1560
    %v1562 = vpop.f32.mrf.mxu0
    %v1563 = vadd.f32 %v1514, %v1562
    %1564 = vmatmul.bf16.gmra.mxu0 %v1123
    %v1565 = vpop.f32.mrf.mxu0
    %v1566 = vadd.f32 %v1517, %v1565
    %v1567 = vpop.f32.mrf.mxu0
    %v1568 = vadd.f32 %v1519, %v1567
    %1569 = vmatmul.bf16.gmra.mxu0 %v1127
    %v1570 = vpop.f32.mrf.mxu0
    %v1571 = vadd.f32 %v1522, %v1570
    %v1572 = vpop.f32.mrf.mxu0
    %v1573 = vadd.f32 %v1524, %v1572
    %1574 = vmatmul.bf16.gmra.mxu0 %v1131
    %v1575 = vpop.f32.mrf.mxu0
    %v1576 = vadd.f32 %v1527, %v1575
    %v1577 = vpop.f32.mrf.mxu0
    %v1578 = vadd.f32 %v1529, %v1577
    %1579 = vmatmul.bf16.gmra.mxu0 %v1135
    %v1580 = vpop.f32.mrf.mxu0
    %v1581 = vadd.f32 %v1532, %v1580
    %v1582 = vpop.f32.mrf.mxu0
    %v1583 = vadd.f32 %v1534, %v1582
    %1584 = vmatmul.bf16.gmra.mxu0 %v1139
    %v1585 = vpop.f32.mrf.mxu0
    %v1586 = vadd.f32 %v1537, %v1585
    %v1587 = vpop.f32.mrf.mxu0
    %v1588 = vadd.f32 %v1539, %v1587
    %1589 = vmatmul.bf16.gmra.mxu0 %v1143
    %v1590 = vpop.f32.mrf.mxu0
    %v1591 = vadd.f32 %v1542, %v1590
    %v1592 = vpop.f32.mrf.mxu0
    %v1593 = vadd.f32 %v1544, %v1592
    %1594 = vmatmul.bf16.gmra.mxu0 %v1147
    %v1595 = vpop.f32.mrf.mxu0
    %v1596 = vadd.f32 %v1547, %v1595
    %v1597 = vpop.f32.mrf.mxu0
    %v1598 = vadd.f32 %v1549, %v1597
    %1599 = vdwg.mxu0
    %v1600 = vadd.f32 %v1100, %v1561
    %v1601 = vadd.f32 %v1101, %v1563
    %v1602 = vadd.f32 %v1102, %v1566
    %v1603 = vadd.f32 %v1103, %v1568
    %v1604 = vadd.f32 %v1104, %v1571
    %v1605 = vadd.f32 %v1105, %v1573
    %v1606 = vadd.f32 %v1106, %v1576
    %v1607 = vadd.f32 %v1107, %v1578
    %v1608 = vadd.f32 %v1108, %v1581
    %v1609 = vadd.f32 %v1109, %v1583
    %v1610 = vadd.f32 %v1110, %v1586
    %v1611 = vadd.f32 %v1111, %v1588
    %v1612 = vadd.f32 %v1112, %v1591
    %v1613 = vadd.f32 %v1113, %v1593
    %v1614 = vadd.f32 %v1114, %v1596
    %v1615 = vadd.f32 %v1115, %v1598
    %1616 = vst [vmem:[#allocation2] sm:$0xff] %v1600
    %1617 = vst [vmem:[#allocation2 + $0x8] sm:$0xff] %v1601
    %1618 = vst [vmem:[#allocation2 + $0x10] sm:$0xff] %v1602
    %1619 = vst [vmem:[#allocation2 + $0x18] sm:$0xff] %v1603
    %1620 = vst [vmem:[#allocation2 + $0x20] sm:$0xff] %v1604
    %1621 = vst [vmem:[#allocation2 + $0x28] sm:$0xff] %v1605
    %1622 = vst [vmem:[#allocation2 + $0x30] sm:$0xff] %v1606
    %1623 = vst [vmem:[#allocation2 + $0x38] sm:$0xff] %v1607
    %1624 = vst [vmem:[#allocation2 + $0x40] sm:$0xff] %v1608
    %1625 = vst [vmem:[#allocation2 + $0x48] sm:$0xff] %v1609
    %1626 = vst [vmem:[#allocation2 + $0x50] sm:$0xff] %v1610
    %1627 = vst [vmem:[#allocation2 + $0x58] sm:$0xff] %v1611
    %1628 = vst [vmem:[#allocation2 + $0x60] sm:$0xff] %v1612
    %1629 = vst [vmem:[#allocation2 + $0x68] sm:$0xff] %v1613
    %1630 = vst [vmem:[#allocation2 + $0x70] sm:$0xff] %v1614
    %1631 = vst [vmem:[#allocation2 + $0x78] sm:$0xff] %v1615
    // Predicated region
    $region42: #{tpu_custom_call.1} parent=1 // pred_check
      %p1632 = pneg %p82
    $region43: #{tpu_custom_call.1} parent=1 // pred_check_branch
      %1634 = sbr.rel (%p1632) target = $region45
    $region44: #{tpu_custom_call.1} parent=1 // pred_region
      %v1635 = vld [vmem:[#allocation2] sm:$0xff]
      %v1636 = vld [vmem:[#allocation2 + $0x8] sm:$0xff]
      %v1637 = vld [vmem:[#allocation2 + $0x10] sm:$0xff]
      %v1638 = vld [vmem:[#allocation2 + $0x18] sm:$0xff]
      %v1639 = vld [vmem:[#allocation2 + $0x20] sm:$0xff]
      %v1640 = vld [vmem:[#allocation2 + $0x28] sm:$0xff]
      %v1641 = vld [vmem:[#allocation2 + $0x30] sm:$0xff]
      %v1642 = vld [vmem:[#allocation2 + $0x38] sm:$0xff]
      %v1643 = vld [vmem:[#allocation2 + $0x40] sm:$0xff]
      %v1644 = vld [vmem:[#allocation2 + $0x48] sm:$0xff]
      %v1645 = vld [vmem:[#allocation2 + $0x50] sm:$0xff]
      %v1646 = vld [vmem:[#allocation2 + $0x58] sm:$0xff]
      %v1647 = vld [vmem:[#allocation2 + $0x60] sm:$0xff]
      %v1648 = vld [vmem:[#allocation2 + $0x68] sm:$0xff]
      %v1649 = vld [vmem:[#allocation2 + $0x70] sm:$0xff]
      %v1650 = vld [vmem:[#allocation2 + $0x78] sm:$0xff]
      %v1651 = vld [vmem:[%s4] sm:$0x1]
      %v1653 = vperm.slane %v1651, 0
      %v1655 = vadd.f32 %v1635, %v1653
      %v1656 = vadd.f32 %v1636, %v1653
      %v1657 = vadd.f32 %v1637, %v1653
      %v1658 = vadd.f32 %v1638, %v1653
      %v1659 = vadd.f32 %v1639, %v1653
      %v1660 = vadd.f32 %v1640, %v1653
      %v1661 = vadd.f32 %v1641, %v1653
      %v1662 = vadd.f32 %v1642, %v1653
      %v1663 = vadd.f32 %v1643, %v1653
      %v1664 = vadd.f32 %v1644, %v1653
      %v1665 = vadd.f32 %v1645, %v1653
      %v1666 = vadd.f32 %v1646, %v1653
      %v1667 = vadd.f32 %v1647, %v1653
      %v1668 = vadd.f32 %v1648, %v1653
      %v1669 = vadd.f32 %v1649, %v1653
      %v1670 = vadd.f32 %v1650, %v1653
      %1671 = vst [vmem:[#allocation11] sm:$0xff] %v1655
      %1672 = vst [vmem:[#allocation11 + $0x8] sm:$0xff] %v1656
      %1673 = vst [vmem:[#allocation11 + $0x10] sm:$0xff] %v1657
      %1674 = vst [vmem:[#allocation11 + $0x18] sm:$0xff] %v1658
      %1675 = vst [vmem:[#allocation11 + $0x20] sm:$0xff] %v1659
      %1676 = vst [vmem:[#allocation11 + $0x28] sm:$0xff] %v1660
      %1677 = vst [vmem:[#allocation11 + $0x30] sm:$0xff] %v1661
      %1678 = vst [vmem:[#allocation11 + $0x38] sm:$0xff] %v1662
      %1679 = vst [vmem:[#allocation11 + $0x40] sm:$0xff] %v1663
      %1680 = vst [vmem:[#allocation11 + $0x48] sm:$0xff] %v1664
      %1681 = vst [vmem:[#allocation11 + $0x50] sm:$0xff] %v1665
      %1682 = vst [vmem:[#allocation11 + $0x58] sm:$0xff] %v1666
      %1683 = vst [vmem:[#allocation11 + $0x60] sm:$0xff] %v1667
      %1684 = vst [vmem:[#allocation11 + $0x68] sm:$0xff] %v1668
      %1685 = vst [vmem:[#allocation11 + $0x70] sm:$0xff] %v1669
      %1686 = vst [vmem:[#allocation11 + $0x78] sm:$0xff] %v1670
    $region45: #{tpu_custom_call.1} parent=1 // pred_fallthru
      _
    // Predicated region
    $region46: #{tpu_custom_call.1} parent=1 // pred_check
      _
    $region47: #{tpu_custom_call.1} parent=1 // pred_check_branch
      %1688 = sbr.rel (0) target = $region49
    $region48: #{tpu_custom_call.1} parent=1 // pred_region
      %1690 = vsyncadd [#allocation5], 0
      %s1691 = sshll.u32 [#allocation11], 4
      %s1692 = int_to_ptr.vmem [resolvable:$true] %s1691
      %s1693 = sshll.u32 %s5, 4
      %s1694 = int_to_ptr.hbm [resolvable:$true] %s1693
      %1699 = dma.vmem_to_hbm [thread:$0]  %s1692, 2048, %s1694, [#allocation5], 128, 128, 8
    $region49: #{tpu_custom_call.1} parent=1 // pred_fallthru
      _
    // Predicated region
    $region50: #{tpu_custom_call.1} parent=1 // pred_check
      _
    $region51: #{tpu_custom_call.1} parent=1 // pred_check_branch
      %1701 = sbr.rel (0) target = $region53
    $region52: #{tpu_custom_call.1} parent=1 // pred_region
      %1703 = dma.done [#allocation5], 2048
    $region53: #{tpu_custom_call.1} parent=1 // pred_fallthru
      _
    %1704 = vsyncpa [#allocation4], 1
    %1705 = vsyncpa [#allocation7], 1
    %1706 = vsyncpa [#allocation10], 1
    %1707 = vsyncpa [#allocation5], 1

</llo_original>
